<compile_context>
chip_gen: v7x
topology: tpu7x:2x2x1
jax: 0.10.0
libtpu: 0.0.40
codegen_flags: <defaults>
</compile_context>

<pallas_src>
import jax
import jax.numpy as jnp
from jax.experimental import pallas as pl
from jax.experimental.pallas import tpu as pltpu

LATENT = 16
HIDDEN = 256
IN_DIM = 784
DEFAULT_TB = 512      # batch rows per grid step (multiple of 8 sublanes; safe on v5e VMEM)


def _round_up(n, m):
    return (n + m - 1) // m * m


def _pick_tb(batch, tb_req):
    """Pick the batch tile: multiple of 8, <= requested, and (when possible) giving
    >= 2 grid steps so v7x can split the 'parallel' axis across its 2 TensorCores."""
    b8 = _round_up(batch, 8)
    if b8 <= 16:
        return b8
    half = _round_up(pl.cdiv(b8, 2), 8)
    return min(tb_req, half)


def vae_kernel(x_ref, w1_ref, b1_ref, w2_ref, b2_ref,
               w3_ref, b3_ref, w4_ref, b4_ref, eps_ref,
               recon_ref, h_ref):
    # ---- encoder: Linear(784,256) -> ReLU -> Linear(256,32) ----
    x = x_ref[...]                                            # bf16 already (wrapper cast)
    h1 = jnp.dot(x, w1_ref[...], preferred_element_type=jnp.float32) + b1_ref[...]
    h1 = jnp.maximum(h1, 0.0).astype(jnp.bfloat16)
    h = jnp.dot(h1, w2_ref[...], preferred_element_type=jnp.float32) + b2_ref[...]
    h_ref[...] = h                                            # merged [mu | logvar]

    # ---- reparameterize: z = mu + eps * exp(0.5 * logvar) ----
    mu = h[:, :LATENT]
    logvar = h[:, LATENT:]
    z = (mu + eps_ref[...] * jnp.exp(0.5 * logvar)).astype(jnp.bfloat16)

    # ---- decoder: Linear(16,256) -> ReLU -> Linear(256,784) -> Sigmoid ----
    d1 = jnp.dot(z, w3_ref[...], preferred_element_type=jnp.float32) + b3_ref[...]
    d1 = jnp.maximum(d1, 0.0).astype(jnp.bfloat16)
    logits = jnp.dot(d1, w4_ref[...], preferred_element_type=jnp.float32) + b4_ref[...]
    # sigmoid: exp + approx reciprocal both land on the EUP slot (VPU stays free)
    recon_ref[...] = pl.reciprocal(1.0 + jnp.exp(-logits), approx=True)


def prepare_params(params):
    """Convert the nn.Linear weights for the kernel: (in, out) layout, bf16 weights
    (MXU-native), f32 biases.  No feature-dim padding anymore."""
    w1, b1, w2, b2, w3, b3, w4, b4 = params
    return (w1.astype(jnp.bfloat16), b1,
            w2.astype(jnp.bfloat16), b2,
            w3.astype(jnp.bfloat16), b3,
            w4.astype(jnp.bfloat16), b4)


def vae_forward(x_nchw, kparams, eps, *, tb=DEFAULT_TB):
    """x_nchw: (B,1,28,28) f32 (or bf16); kparams: prepare_params(...); eps: (B,16) f32."""
    B = x_nchw.shape[0]
    x2 = x_nchw.reshape(B, IN_DIM).astype(jnp.bfloat16)       # == torch x.view(-1, 784)

    tb = _pick_tb(B, tb)
    Bp = _round_up(B, tb)
    if Bp != B:
        xp = jnp.zeros((Bp, IN_DIM), jnp.bfloat16).at[:B].set(x2)
        epsp = jnp.zeros((Bp, LATENT), jnp.float32).at[:B].set(eps)
    else:
        xp, epsp = x2, eps

    w1, b1, w2, b2, w3, b3, w4, b4 = kparams

    def resident(arr):
        # Full-array block, constant index, single-buffered: fetched once, lives in
        # VMEM across all grid steps (no second pipeline buffer wasted).
        return pl.BlockSpec(arr.shape, lambda i: (0, 0), pipeline_mode=pl.Buffered(1))

    in_specs = [
        pl.BlockSpec((tb, IN_DIM), lambda i: (i, 0)),         # x tile (bf16, 784 wide)
        resident(w1), resident(b1),
        resident(w2), resident(b2),
        resident(w3), resident(b3),
        resident(w4), resident(b4),
        pl.BlockSpec((tb, LATENT), lambda i: (i, 0)),         # eps tile
    ]
    out_specs = (
        pl.BlockSpec((tb, IN_DIM), lambda i: (i, 0)),         # recon (784 wide, f32)
        pl.BlockSpec((tb, 2 * LATENT), lambda i: (i, 0)),     # h = [mu | logvar]
    )
    out_shapes = (
        jax.ShapeDtypeStruct((Bp, IN_DIM), jnp.float32),
        jax.ShapeDtypeStruct((Bp, 2 * LATENT), jnp.float32),
    )

    # Advisory cost model: ~0.83 MFLOP/row, exp on 16+784 elems/row, streams listed once.
    flops = 2 * Bp * (IN_DIM * HIDDEN + HIDDEN * 2 * LATENT + LATENT * HIDDEN + HIDDEN * IN_DIM)
    transcendentals = Bp * (LATENT + IN_DIM)
    bytes_accessed = (
        Bp * IN_DIM * 2                      # x in (bf16)
        + Bp * LATENT * 4                    # eps in
        + Bp * IN_DIM * 4                    # recon out
        + Bp * 2 * LATENT * 4                # h out
        + (IN_DIM * HIDDEN + HIDDEN * 2 * LATENT + LATENT * HIDDEN + HIDDEN * IN_DIM) * 2
        + (HIDDEN + 2 * LATENT + HIDDEN + IN_DIM) * 4
    )

    # VMEM @ tb=512: x bf16 ~0.8 MiB + recon f32 ~1.6 MiB (x2 pipeline buffers) +
    # ~0.9 MiB single-buffered weights -> well under the 16 MiB default scoped limit.
    # Pass vmem_limit_bytes via compiler_params only if tb is pushed to 2048 (v7x).
    recon, h = pl.pallas_call(
        vae_kernel,
        out_shape=out_shapes,
        grid=(Bp // tb,),
        in_specs=in_specs,
        out_specs=out_specs,
        compiler_params=pltpu.CompilerParams(
            dimension_semantics=("parallel",),                # v7x: shard batch over 2 TCs
        ),
        cost_estimate=pl.CostEstimate(flops=flops,
                                      transcendentals=transcendentals,
                                      bytes_accessed=bytes_accessed),
    )(xp, w1, b1, w2, b2, w3, b3, w4, b4, epsp)

    if Bp != B:
        recon = recon[:B]
        h = h[:B]
    mu = h[:, :LATENT]
    logvar = h[:, LATENT:]
    return recon, mu, logvar


def init_params(key):
    """Deterministic synthetic weights with the nn.Linear shapes (transposed to (in, out))."""
    ks = jax.random.split(key, 8)

    def lin(kw, kb, fan_in, fan_out):
        bound = 1.0 / jnp.sqrt(fan_in)
        w = jax.random.uniform(kw, (fan_in, fan_out), jnp.float32, -bound, bound)
        b = jax.random.uniform(kb, (1, fan_out), jnp.float32, -bound, bound)
        return w, b

    w1, b1 = lin(ks[0], ks[1], IN_DIM, HIDDEN)       # encoder.0 : Linear(784, 256)
    w2, b2 = lin(ks[2], ks[3], HIDDEN, 2 * LATENT)   # encoder.2 : Linear(256, 32)
    w3, b3 = lin(ks[4], ks[5], LATENT, HIDDEN)       # decoder.0 : Linear(16, 256)
    w4, b4 = lin(ks[6], ks[7], HIDDEN, IN_DIM)       # decoder.2 : Linear(256, 784)
    return (w1, b1, w2, b2, w3, b3, w4, b4)


def vae_forward_ref(x_nchw, params, eps):
    """Pure-JAX reference matching the kernel's numerics (bf16 operands on every matmul,
    f32 accumulation) with the PyTorch forward semantics."""
    w1, b1, w2, b2, w3, b3, w4, b4 = params
    x = x_nchw.reshape(x_nchw.shape[0], IN_DIM).astype(jnp.bfloat16)
    h1 = jnp.maximum(
        jnp.dot(x, w1.astype(jnp.bfloat16), preferred_element_type=jnp.float32) + b1, 0.0)
    h = jnp.dot(h1.astype(jnp.bfloat16), w2.astype(jnp.bfloat16),
                preferred_element_type=jnp.float32) + b2
    mu, logvar = h[:, :LATENT], h[:, LATENT:]
    z = (mu + eps * jnp.exp(0.5 * logvar)).astype(jnp.bfloat16)
    d1 = jnp.maximum(
        jnp.dot(z, w3.astype(jnp.bfloat16), preferred_element_type=jnp.float32) + b3, 0.0)
    logits = jnp.dot(d1.astype(jnp.bfloat16), w4.astype(jnp.bfloat16),
                     preferred_element_type=jnp.float32) + b4
    return jax.nn.sigmoid(logits), mu, logvar


if __name__ == "__main__":
    key = jax.random.PRNGKey(0)
    k_param, k_x, k_eps = jax.random.split(key, 3)

    B = 2
    params = init_params(k_param)
    kparams = prepare_params(params)
    x = jax.random.uniform(k_x, (B, 1, 28, 28), jnp.float32)     # NCHW, like MNIST
    eps = jax.random.normal(k_eps, (B, LATENT), jnp.float32)     # torch.randn_like(std)

    recon, mu, logvar = jax.block_until_ready(vae_forward(x, kparams, eps))

    r_ref, mu_ref, lv_ref = vae_forward_ref(x, params, eps)
    assert recon.shape == (B, IN_DIM) and mu.shape == (B, LATENT) and logvar.shape == (B, LATENT)
    # Tolerances absorb MXU accumulation-order differences and the EUP approx reciprocal
    # in the sigmoid (<~1e-3 abs); the bf16 matmul numerics are matched by the reference.
    assert jnp.allclose(mu, mu_ref, atol=5e-3, rtol=5e-3)
    assert jnp.allclose(logvar, lv_ref, atol=5e-3, rtol=5e-3)
    assert jnp.allclose(recon, r_ref, atol=5e-3)

    print("KERNEL_OK")
</pallas_src>

<mosaic_0001>
module attributes {stable_mosaic.version = 11 : i64} {
  func.func @vae_kernel(%arg0: i32, %arg1: memref<8x784xbf16, #tpu.memory_space<vmem>>, %arg2: memref<784x256xbf16, #tpu.memory_space<vmem>>, %arg3: memref<1x256xf32, #tpu.memory_space<vmem>>, %arg4: memref<256x32xbf16, #tpu.memory_space<vmem>>, %arg5: memref<1x32xf32, #tpu.memory_space<vmem>>, %arg6: memref<16x256xbf16, #tpu.memory_space<vmem>>, %arg7: memref<1x256xf32, #tpu.memory_space<vmem>>, %arg8: memref<256x784xbf16, #tpu.memory_space<vmem>>, %arg9: memref<1x784xf32, #tpu.memory_space<vmem>>, %arg10: memref<8x16xf32, #tpu.memory_space<vmem>>, %arg11: memref<8x784xf32, #tpu.memory_space<vmem>>, %arg12: memref<8x32xf32, #tpu.memory_space<vmem>>) attributes {dimension_semantics = [#tpu.dimension_semantics<parallel>], iteration_bounds = array<i64: 1>, scalar_prefetch = 0 : i64, scratch_operands = 0 : i64, tpu.core_type = #tpu.core_type<tc>, window_params = [{transform_indices = @transform_0, window_bounds = array<i64: 8, 784>}, {pipeline_mode = #tpu.pipeline_mode<synchronous>, transform_indices = @transform_1, window_bounds = array<i64: 784, 256>}, {pipeline_mode = #tpu.pipeline_mode<synchronous>, transform_indices = @transform_2, window_bounds = array<i64: 1, 256>}, {pipeline_mode = #tpu.pipeline_mode<synchronous>, transform_indices = @transform_3, window_bounds = array<i64: 256, 32>}, {pipeline_mode = #tpu.pipeline_mode<synchronous>, transform_indices = @transform_4, window_bounds = array<i64: 1, 32>}, {pipeline_mode = #tpu.pipeline_mode<synchronous>, transform_indices = @transform_5, window_bounds = array<i64: 16, 256>}, {pipeline_mode = #tpu.pipeline_mode<synchronous>, transform_indices = @transform_6, window_bounds = array<i64: 1, 256>}, {pipeline_mode = #tpu.pipeline_mode<synchronous>, transform_indices = @transform_7, window_bounds = array<i64: 256, 784>}, {pipeline_mode = #tpu.pipeline_mode<synchronous>, transform_indices = @transform_8, window_bounds = array<i64: 1, 784>}, {transform_indices = @transform_9, window_bounds = array<i64: 8, 16>}, {transform_indices = @transform_10, window_bounds = array<i64: 8, 784>}, {transform_indices = @transform_11, window_bounds = array<i64: 8, 32>}]} {
    %c0 = arith.constant 0 : index
    %c0_0 = arith.constant 0 : index
    %0 = vector.load %arg1[%c0, %c0_0] : memref<8x784xbf16, #tpu.memory_space<vmem>>, vector<8x784xbf16>
    %c0_1 = arith.constant 0 : index
    %c0_2 = arith.constant 0 : index
    %1 = vector.load %arg2[%c0_1, %c0_2] : memref<784x256xbf16, #tpu.memory_space<vmem>>, vector<784x256xbf16>
    %cst = arith.constant dense<0.000000e+00> : vector<8x256xf32>
    %2 = tpu.matmul %0, %1, %cst {dimension_numbers = #tpu.dot_dimension_numbers<[1], [0], [0], [1], [0, 0, 1, 1], [], []>} : vector<8x784xbf16>, vector<784x256xbf16>, vector<8x256xf32> -> vector<8x256xf32>
    %c0_3 = arith.constant 0 : index
    %c0_4 = arith.constant 0 : index
    %3 = vector.load %arg3[%c0_3, %c0_4] : memref<1x256xf32, #tpu.memory_space<vmem>>, vector<1x256xf32>
    %4 = vector.broadcast %3 : vector<1x256xf32> to vector<8x256xf32>
    %5 = arith.addf %2, %4 : vector<8x256xf32>
    %cst_5 = arith.constant 0.000000e+00 : f32
    %6 = vector.broadcast %cst_5 : f32 to vector<8x256xf32>
    %7 = arith.maximumf %5, %6 : vector<8x256xf32>
    %8 = arith.truncf %7 : vector<8x256xf32> to vector<8x256xbf16>
    %c0_6 = arith.constant 0 : index
    %c0_7 = arith.constant 0 : index
    %9 = vector.load %arg4[%c0_6, %c0_7] : memref<256x32xbf16, #tpu.memory_space<vmem>>, vector<256x32xbf16>
    %cst_8 = arith.constant dense<0.000000e+00> : vector<8x32xf32>
    %10 = tpu.matmul %8, %9, %cst_8 {dimension_numbers = #tpu.dot_dimension_numbers<[1], [0], [0], [1], [0, 0, 1, 1], [], []>} : vector<8x256xbf16>, vector<256x32xbf16>, vector<8x32xf32> -> vector<8x32xf32>
    %c0_9 = arith.constant 0 : index
    %c0_10 = arith.constant 0 : index
    %11 = vector.load %arg5[%c0_9, %c0_10] : memref<1x32xf32, #tpu.memory_space<vmem>>, vector<1x32xf32>
    %12 = vector.broadcast %11 : vector<1x32xf32> to vector<8x32xf32>
    %13 = arith.addf %10, %12 : vector<8x32xf32>
    %c0_11 = arith.constant 0 : index
    %c0_12 = arith.constant 0 : index
    %14 = vector.load %arg12[%c0_11, %c0_12] : memref<8x32xf32, #tpu.memory_space<vmem>>, vector<8x32xf32>
    tpu.vector_store %arg12[%c0_11, %c0_12], %13 {strides = array<i32>} : memref<8x32xf32, #tpu.memory_space<vmem>>, vector<8x32xf32>,
    %15 = vector.extract_strided_slice %13 {offsets = [0, 0], sizes = [8, 16], strides = [1, 1]} : vector<8x32xf32> to vector<8x16xf32>
    %16 = vector.extract_strided_slice %13 {offsets = [0, 16], sizes = [8, 16], strides = [1, 1]} : vector<8x32xf32> to vector<8x16xf32>
    %c0_13 = arith.constant 0 : index
    %c0_14 = arith.constant 0 : index
    %17 = vector.load %arg10[%c0_13, %c0_14] : memref<8x16xf32, #tpu.memory_space<vmem>>, vector<8x16xf32>
    %cst_15 = arith.constant 5.000000e-01 : f32
    %18 = vector.broadcast %cst_15 : f32 to vector<8x16xf32>
    %19 = arith.mulf %18, %16 : vector<8x16xf32>
    %20 = math.exp %19 : vector<8x16xf32>
    %21 = arith.mulf %17, %20 : vector<8x16xf32>
    %22 = arith.addf %15, %21 : vector<8x16xf32>
    %23 = arith.truncf %22 : vector<8x16xf32> to vector<8x16xbf16>
    %c0_16 = arith.constant 0 : index
    %c0_17 = arith.constant 0 : index
    %24 = vector.load %arg6[%c0_16, %c0_17] : memref<16x256xbf16, #tpu.memory_space<vmem>>, vector<16x256xbf16>
    %cst_18 = arith.constant dense<0.000000e+00> : vector<8x256xf32>
    %25 = tpu.matmul %23, %24, %cst_18 {dimension_numbers = #tpu.dot_dimension_numbers<[1], [0], [0], [1], [0, 0, 1, 1], [], []>} : vector<8x16xbf16>, vector<16x256xbf16>, vector<8x256xf32> -> vector<8x256xf32>
    %c0_19 = arith.constant 0 : index
    %c0_20 = arith.constant 0 : index
    %26 = vector.load %arg7[%c0_19, %c0_20] : memref<1x256xf32, #tpu.memory_space<vmem>>, vector<1x256xf32>
    %27 = vector.broadcast %26 : vector<1x256xf32> to vector<8x256xf32>
    %28 = arith.addf %25, %27 : vector<8x256xf32>
    %cst_21 = arith.constant 0.000000e+00 : f32
    %29 = vector.broadcast %cst_21 : f32 to vector<8x256xf32>
    %30 = arith.maximumf %28, %29 : vector<8x256xf32>
    %31 = arith.truncf %30 : vector<8x256xf32> to vector<8x256xbf16>
    %c0_22 = arith.constant 0 : index
    %c0_23 = arith.constant 0 : index
    %32 = vector.load %arg8[%c0_22, %c0_23] : memref<256x784xbf16, #tpu.memory_space<vmem>>, vector<256x784xbf16>
    %cst_24 = arith.constant dense<0.000000e+00> : vector<8x784xf32>
    %33 = tpu.matmul %31, %32, %cst_24 {dimension_numbers = #tpu.dot_dimension_numbers<[1], [0], [0], [1], [0, 0, 1, 1], [], []>} : vector<8x256xbf16>, vector<256x784xbf16>, vector<8x784xf32> -> vector<8x784xf32>
    %c0_25 = arith.constant 0 : index
    %c0_26 = arith.constant 0 : index
    %34 = vector.load %arg9[%c0_25, %c0_26] : memref<1x784xf32, #tpu.memory_space<vmem>>, vector<1x784xf32>
    %35 = vector.broadcast %34 : vector<1x784xf32> to vector<8x784xf32>
    %36 = arith.addf %33, %35 : vector<8x784xf32>
    %cst_27 = arith.constant 0.000000e+00 : f32
    %37 = vector.broadcast %cst_27 : f32 to vector<8x784xf32>
    %38 = arith.subf %37, %36 : vector<8x784xf32>
    %39 = math.exp %38 : vector<8x784xf32>
    %cst_28 = arith.constant 1.000000e+00 : f32
    %40 = vector.broadcast %cst_28 : f32 to vector<8x784xf32>
    %41 = arith.addf %40, %39 : vector<8x784xf32>
    %42 = tpu.reciprocal %41 {approx = true} : vector<8x784xf32> -> vector<8x784xf32>
    %c0_29 = arith.constant 0 : index
    %c0_30 = arith.constant 0 : index
    %43 = vector.load %arg11[%c0_29, %c0_30] : memref<8x784xf32, #tpu.memory_space<vmem>>, vector<8x784xf32>
    tpu.vector_store %arg11[%c0_29, %c0_30], %42 {strides = array<i32>} : memref<8x784xf32, #tpu.memory_space<vmem>>, vector<8x784xf32>,
    return
  }
  func.func @transform_0(%arg0: i32) -> (i32, i32) {
    %c0_i32 = arith.constant 0 : i32
    %c0_i32_0 = arith.constant 0 : i32
    return %arg0, %c0_i32 : i32, i32
  }
  func.func @transform_1(%arg0: i32) -> (i32, i32) {
    %c0_i32 = arith.constant 0 : i32
    %c0_i32_0 = arith.constant 0 : i32
    %c0_i32_1 = arith.constant 0 : i32
    return %c0_i32, %c0_i32_0 : i32, i32
  }
  func.func @transform_2(%arg0: i32) -> (i32, i32) {
    %c0_i32 = arith.constant 0 : i32
    %c0_i32_0 = arith.constant 0 : i32
    %c0_i32_1 = arith.constant 0 : i32
    return %c0_i32, %c0_i32_0 : i32, i32
  }
  func.func @transform_3(%arg0: i32) -> (i32, i32) {
    %c0_i32 = arith.constant 0 : i32
    %c0_i32_0 = arith.constant 0 : i32
    %c0_i32_1 = arith.constant 0 : i32
    return %c0_i32, %c0_i32_0 : i32, i32
  }
  func.func @transform_4(%arg0: i32) -> (i32, i32) {
    %c0_i32 = arith.constant 0 : i32
    %c0_i32_0 = arith.constant 0 : i32
    %c0_i32_1 = arith.constant 0 : i32
    return %c0_i32, %c0_i32_0 : i32, i32
  }
  func.func @transform_5(%arg0: i32) -> (i32, i32) {
    %c0_i32 = arith.constant 0 : i32
    %c0_i32_0 = arith.constant 0 : i32
    %c0_i32_1 = arith.constant 0 : i32
    return %c0_i32, %c0_i32_0 : i32, i32
  }
  func.func @transform_6(%arg0: i32) -> (i32, i32) {
    %c0_i32 = arith.constant 0 : i32
    %c0_i32_0 = arith.constant 0 : i32
    %c0_i32_1 = arith.constant 0 : i32
    return %c0_i32, %c0_i32_0 : i32, i32
  }
  func.func @transform_7(%arg0: i32) -> (i32, i32) {
    %c0_i32 = arith.constant 0 : i32
    %c0_i32_0 = arith.constant 0 : i32
    %c0_i32_1 = arith.constant 0 : i32
    return %c0_i32, %c0_i32_0 : i32, i32
  }
  func.func @transform_8(%arg0: i32) -> (i32, i32) {
    %c0_i32 = arith.constant 0 : i32
    %c0_i32_0 = arith.constant 0 : i32
    %c0_i32_1 = arith.constant 0 : i32
    return %c0_i32, %c0_i32_0 : i32, i32
  }
  func.func @transform_9(%arg0: i32) -> (i32, i32) {
    %c0_i32 = arith.constant 0 : i32
    %c0_i32_0 = arith.constant 0 : i32
    return %arg0, %c0_i32 : i32, i32
  }
  func.func @transform_10(%arg0: i32) -> (i32, i32) {
    %c0_i32 = arith.constant 0 : i32
    %c0_i32_0 = arith.constant 0 : i32
    return %arg0, %c0_i32 : i32, i32
  }
  func.func @transform_11(%arg0: i32) -> (i32, i32) {
    %c0_i32 = arith.constant 0 : i32
    %c0_i32_0 = arith.constant 0 : i32
    return %arg0, %c0_i32 : i32, i32
  }
}

</mosaic_0001>

<llo_original>
// kernel: tpu_custom_call.1
$region0: #{tpu_custom_call.1}
  #allocation0 [shape = 'u32[]', space=smem, size = 0x4, offset = 0x4, fixed_abs, tag = 'smem constant byte address 0x4 - core index']
  #allocation1 [shape = 'u32[144,128]{1,0:T(1,128)}', space=vmem, size = 0x12000, scoped, tag = 'internal scratch']
  %s0 = inlined_call_operand.vmem [shape: bf16[8,784], index: 0, kind: input, shape index: {}]
  %s1 = inlined_call_operand.vmem [shape: bf16[784,256], index: 1, kind: input, shape index: {}]
  %s2 = inlined_call_operand.vmem [shape: f32[1,256], index: 2, kind: input, shape index: {}]
  %s3 = inlined_call_operand.vmem [shape: bf16[256,32], index: 3, kind: input, shape index: {}]
  %s4 = inlined_call_operand.vmem [shape: f32[1,32], index: 4, kind: input, shape index: {}]
  %s5 = inlined_call_operand.vmem [shape: bf16[16,256], index: 5, kind: input, shape index: {}]
  %s6 = inlined_call_operand.vmem [shape: f32[1,256], index: 6, kind: input, shape index: {}]
  %s7 = inlined_call_operand.vmem [shape: bf16[256,784], index: 7, kind: input, shape index: {}]
  %s8 = inlined_call_operand.vmem [shape: f32[1,784], index: 8, kind: input, shape index: {}]
  %s9 = inlined_call_operand.vmem [shape: f32[8,16], index: 9, kind: input, shape index: {}]
  %s10 = inlined_call_operand.hbm [shape: f32[8,784], index: 10, kind: output, shape index: {0}]
  %s11 = inlined_call_operand.hbm [shape: f32[8,32], index: 11, kind: output, shape index: {1}]
  %12 = xla_tuple %s10, %s11
  %s13 = sld [smem:[#allocation0]]
  $region58: #{tpu_custom_call.1} parent=0
    _
  %s15 = ssub.s32 1, %s13
  %s16 = scalar_select 0, %s15, %s13
  $region1: #{tpu_custom_call.1} parent=0
    #allocation2 [shape = 'u8[28672]{0}', space=vmem, size = 0x7000, scoped, tag = 'output window, operand 0, single buffered']
    #allocation3 [shape = 's32[1]{0}', space=sflag, size = 0x4, scoped, tag = 'scoped memory for tpu_custom_call.1']
    #allocation4 [shape = 'u8[4096]{0}', space=vmem, size = 0x1000, scoped, tag = 'output window, operand 1, single buffered']
    #allocation5 [shape = 's32[1]{0}', space=sflag, size = 0x4, scoped, tag = 'scoped memory for tpu_custom_call.1']
    %17 = vsyncpa [#allocation3], 0
    %18 = vsyncpa [#allocation5], 0
    // Predicated region
    $region2: #{tpu_custom_call.1} parent=1 // pred_check
      _
    $region3: #{tpu_custom_call.1} parent=1 // pred_check_branch
      %20 = sbr.rel (0) target = $region5
    $region4: #{tpu_custom_call.1} parent=1 // pred_region
      _
    $region5: #{tpu_custom_call.1} parent=1 // pred_fallthru
      _
    // Predicated region
    $region6: #{tpu_custom_call.1} parent=1 // pred_check
      _
    $region7: #{tpu_custom_call.1} parent=1 // pred_check_branch
      %22 = sbr.rel (0) target = $region9
    $region8: #{tpu_custom_call.1} parent=1 // pred_region
      _
    $region9: #{tpu_custom_call.1} parent=1 // pred_fallthru
      _
    // Predicated region
    $region10: #{tpu_custom_call.1} parent=1 // pred_check
      _
    $region11: #{tpu_custom_call.1} parent=1 // pred_check_branch
      %24 = sbr.rel (0) target = $region13
    $region12: #{tpu_custom_call.1} parent=1 // pred_region
      _
    $region13: #{tpu_custom_call.1} parent=1 // pred_fallthru
      _
    // Predicated region
    $region14: #{tpu_custom_call.1} parent=1 // pred_check
      _
    $region15: #{tpu_custom_call.1} parent=1 // pred_check_branch
      %26 = sbr.rel (0) target = $region17
    $region16: #{tpu_custom_call.1} parent=1 // pred_region
      _
    $region17: #{tpu_custom_call.1} parent=1 // pred_fallthru
      _
    // Predicated region
    $region18: #{tpu_custom_call.1} parent=1 // pred_check
      _
    $region19: #{tpu_custom_call.1} parent=1 // pred_check_branch
      %28 = sbr.rel (0) target = $region21
    $region20: #{tpu_custom_call.1} parent=1 // pred_region
      _
    $region21: #{tpu_custom_call.1} parent=1 // pred_fallthru
      _
    // Predicated region
    $region22: #{tpu_custom_call.1} parent=1 // pred_check
      _
    $region23: #{tpu_custom_call.1} parent=1 // pred_check_branch
      %30 = sbr.rel (0) target = $region25
    $region24: #{tpu_custom_call.1} parent=1 // pred_region
      _
    $region25: #{tpu_custom_call.1} parent=1 // pred_fallthru
      _
    // Predicated region
    $region26: #{tpu_custom_call.1} parent=1 // pred_check
      _
    $region27: #{tpu_custom_call.1} parent=1 // pred_check_branch
      %32 = sbr.rel (0) target = $region29
    $region28: #{tpu_custom_call.1} parent=1 // pred_region
      _
    $region29: #{tpu_custom_call.1} parent=1 // pred_fallthru
      _
    // Predicated region
    $region30: #{tpu_custom_call.1} parent=1 // pred_check
      _
    $region31: #{tpu_custom_call.1} parent=1 // pred_check_branch
      %34 = sbr.rel (0) target = $region33
    $region32: #{tpu_custom_call.1} parent=1 // pred_region
      _
    $region33: #{tpu_custom_call.1} parent=1 // pred_fallthru
      _
    // Predicated region
    $region34: #{tpu_custom_call.1} parent=1 // pred_check
      _
    $region35: #{tpu_custom_call.1} parent=1 // pred_check_branch
      %36 = sbr.rel (0) target = $region37
    $region36: #{tpu_custom_call.1} parent=1 // pred_region
      _
    $region37: #{tpu_custom_call.1} parent=1 // pred_fallthru
      _
    // Predicated region
    $region38: #{tpu_custom_call.1} parent=1 // pred_check
      _
    $region39: #{tpu_custom_call.1} parent=1 // pred_check_branch
      %38 = sbr.rel (0) target = $region41
    $region40: #{tpu_custom_call.1} parent=1 // pred_region
      _
    $region41: #{tpu_custom_call.1} parent=1 // pred_fallthru
      _
    %v40 = vld [vmem:[%s0] sm:$0xff]
    %v41 = vld [vmem:[%s0 + $0x8] sm:$0xff]
    %v42 = vld [vmem:[%s0 + $0x10] sm:$0xff]
    %v43 = vld [vmem:[%s0 + $0x18] sm:$0xf]
    %v44 = vld [vmem:[%s1] sm:$0xff]
    %v45 = vld [vmem:[%s1 + $0x8] sm:$0xff]
    %v46 = vld [vmem:[%s1 + $0x10] sm:$0xff]
    %v47 = vld [vmem:[%s1 + $0x18] sm:$0xff]
    %v48 = vld [vmem:[%s1 + $0x20] sm:$0xff]
    %v49 = vld [vmem:[%s1 + $0x28] sm:$0xff]
    %v50 = vld [vmem:[%s1 + $0x30] sm:$0xff]
    %v51 = vld [vmem:[%s1 + $0x38] sm:$0xff]
    %v52 = vld [vmem:[%s1 + $0x40] sm:$0xff]
    %v53 = vld [vmem:[%s1 + $0x48] sm:$0xff]
    %v54 = vld [vmem:[%s1 + $0x50] sm:$0xff]
    %v55 = vld [vmem:[%s1 + $0x58] sm:$0xff]
    %v56 = vld [vmem:[%s1 + $0x60] sm:$0xff]
    %v57 = vld [vmem:[%s1 + $0x68] sm:$0xff]
    %v58 = vld [vmem:[%s1 + $0x70] sm:$0xff]
    %v59 = vld [vmem:[%s1 + $0x78] sm:$0xff]
    %v60 = vld [vmem:[%s1 + $0x80] sm:$0xff]
    %v61 = vld [vmem:[%s1 + $0x88] sm:$0xff]
    %v62 = vld [vmem:[%s1 + $0x90] sm:$0xff]
    %v63 = vld [vmem:[%s1 + $0x98] sm:$0xff]
    %v64 = vld [vmem:[%s1 + $0xa0] sm:$0xff]
    %v65 = vld [vmem:[%s1 + $0xa8] sm:$0xff]
    %v66 = vld [vmem:[%s1 + $0xb0] sm:$0xff]
    %v67 = vld [vmem:[%s1 + $0xb8] sm:$0xff]
    %v68 = vld [vmem:[%s1 + $0xc0] sm:$0xff]
    %v69 = vld [vmem:[%s1 + $0xc8] sm:$0xff]
    %v70 = vld [vmem:[%s1 + $0xd0] sm:$0xff]
    %v71 = vld [vmem:[%s1 + $0xd8] sm:$0xff]
    %v72 = vld [vmem:[%s1 + $0xe0] sm:$0xff]
    %v73 = vld [vmem:[%s1 + $0xe8] sm:$0xff]
    %v74 = vld [vmem:[%s1 + $0xf0] sm:$0xff]
    %v75 = vld [vmem:[%s1 + $0xf8] sm:$0xff]
    %v76 = vld [vmem:[%s1 + $0x100] sm:$0xff]
    %v77 = vld [vmem:[%s1 + $0x108] sm:$0xff]
    %v78 = vld [vmem:[%s1 + $0x110] sm:$0xff]
    %v79 = vld [vmem:[%s1 + $0x118] sm:$0xff]
    %v80 = vld [vmem:[%s1 + $0x120] sm:$0xff]
    %v81 = vld [vmem:[%s1 + $0x128] sm:$0xff]
    %v82 = vld [vmem:[%s1 + $0x130] sm:$0xff]
    %v83 = vld [vmem:[%s1 + $0x138] sm:$0xff]
    %v84 = vld [vmem:[%s1 + $0x140] sm:$0xff]
    %v85 = vld [vmem:[%s1 + $0x148] sm:$0xff]
    %v86 = vld [vmem:[%s1 + $0x150] sm:$0xff]
    %v87 = vld [vmem:[%s1 + $0x158] sm:$0xff]
    %v88 = vld [vmem:[%s1 + $0x160] sm:$0xff]
    %v89 = vld [vmem:[%s1 + $0x168] sm:$0xff]
    %v90 = vld [vmem:[%s1 + $0x170] sm:$0xff]
    %v91 = vld [vmem:[%s1 + $0x178] sm:$0xff]
    %v92 = vld [vmem:[%s1 + $0x180] sm:$0xff]
    %v93 = vld [vmem:[%s1 + $0x188] sm:$0xff]
    %v94 = vld [vmem:[%s1 + $0x190] sm:$0xff]
    %v95 = vld [vmem:[%s1 + $0x198] sm:$0xff]
    %v96 = vld [vmem:[%s1 + $0x1a0] sm:$0xff]
    %v97 = vld [vmem:[%s1 + $0x1a8] sm:$0xff]
    %v98 = vld [vmem:[%s1 + $0x1b0] sm:$0xff]
    %v99 = vld [vmem:[%s1 + $0x1b8] sm:$0xff]
    %v100 = vld [vmem:[%s1 + $0x1c0] sm:$0xff]
    %v101 = vld [vmem:[%s1 + $0x1c8] sm:$0xff]
    %v102 = vld [vmem:[%s1 + $0x1d0] sm:$0xff]
    %v103 = vld [vmem:[%s1 + $0x1d8] sm:$0xff]
    %v104 = vld [vmem:[%s1 + $0x1e0] sm:$0xff]
    %v105 = vld [vmem:[%s1 + $0x1e8] sm:$0xff]
    %v106 = vld [vmem:[%s1 + $0x1f0] sm:$0xff]
    %v107 = vld [vmem:[%s1 + $0x1f8] sm:$0xff]
    %v108 = vld [vmem:[%s1 + $0x200] sm:$0xff]
    %v109 = vld [vmem:[%s1 + $0x208] sm:$0xff]
    %v110 = vld [vmem:[%s1 + $0x210] sm:$0xff]
    %v111 = vld [vmem:[%s1 + $0x218] sm:$0xff]
    %v112 = vld [vmem:[%s1 + $0x220] sm:$0xff]
    %v113 = vld [vmem:[%s1 + $0x228] sm:$0xff]
    %v114 = vld [vmem:[%s1 + $0x230] sm:$0xff]
    %v115 = vld [vmem:[%s1 + $0x238] sm:$0xff]
    %v116 = vld [vmem:[%s1 + $0x240] sm:$0xff]
    %v117 = vld [vmem:[%s1 + $0x248] sm:$0xff]
    %v118 = vld [vmem:[%s1 + $0x250] sm:$0xff]
    %v119 = vld [vmem:[%s1 + $0x258] sm:$0xff]
    %v120 = vld [vmem:[%s1 + $0x260] sm:$0xff]
    %v121 = vld [vmem:[%s1 + $0x268] sm:$0xff]
    %v122 = vld [vmem:[%s1 + $0x270] sm:$0xff]
    %v123 = vld [vmem:[%s1 + $0x278] sm:$0xff]
    %v124 = vld [vmem:[%s1 + $0x280] sm:$0xff]
    %v125 = vld [vmem:[%s1 + $0x288] sm:$0xff]
    %v126 = vld [vmem:[%s1 + $0x290] sm:$0xff]
    %v127 = vld [vmem:[%s1 + $0x298] sm:$0xff]
    %v128 = vld [vmem:[%s1 + $0x2a0] sm:$0xff]
    %v129 = vld [vmem:[%s1 + $0x2a8] sm:$0xff]
    %v130 = vld [vmem:[%s1 + $0x2b0] sm:$0xff]
    %v131 = vld [vmem:[%s1 + $0x2b8] sm:$0xff]
    %v132 = vld [vmem:[%s1 + $0x2c0] sm:$0xff]
    %v133 = vld [vmem:[%s1 + $0x2c8] sm:$0xff]
    %v134 = vld [vmem:[%s1 + $0x2d0] sm:$0xff]
    %v135 = vld [vmem:[%s1 + $0x2d8] sm:$0xff]
    %v136 = vld [vmem:[%s1 + $0x2e0] sm:$0xff]
    %v137 = vld [vmem:[%s1 + $0x2e8] sm:$0xff]
    %v138 = vld [vmem:[%s1 + $0x2f0] sm:$0xff]
    %v139 = vld [vmem:[%s1 + $0x2f8] sm:$0xff]
    %v140 = vld [vmem:[%s1 + $0x300] sm:$0xff]
    %v141 = vld [vmem:[%s1 + $0x308] sm:$0xff]
    %v142 = vld [vmem:[%s2] sm:$0x3]
    %v144 = vlaneseq
    %v145 = vshrl.u32 %v144, 7
    %v146 = vsub.s32 0, %v145
    %v147 = vrot.slane %v142, %v146
    %v148 = vlaneseq
    %v149 = vshrl.u32 %v148, 7
    %v150 = vsub.s32 1, %v149
    %v151 = vrot.slane %v142, %v150
    %v158 = vunpack.c.l.b16 %v40
    %v159 = vunpack.c.h.b16 %v40
    %v160 = vunpack.c.l.b16 %v41
    %v161 = vunpack.c.h.b16 %v41
    %v162 = vunpack.c.l.b16 %v42
    %v163 = vunpack.c.h.b16 %v42
    %v164 = vunpack.c.l.b16 %v43
    %v165 = vpack.c.b16 %v158, %v158
    %v166 = vpack.c.b16 %v159, %v159
    %v167 = vpack.c.b16 %v160, %v160
    %v168 = vpack.c.b16 %v161, %v161
    %v169 = vpack.c.b16 %v162, %v162
    %v170 = vpack.c.b16 %v163, %v163
    %v171 = vpack.c.b16 %v164, %v164
    %v276 = vunpack.c.l.b16 %v44
    %v277 = vunpack.c.h.b16 %v44
    %v278 = vunpack.c.l.b16 %v45
    %v279 = vunpack.c.h.b16 %v45
    %v280 = vunpack.c.l.b16 %v46
    %v281 = vunpack.c.h.b16 %v46
    %v282 = vunpack.c.l.b16 %v47
    %v283 = vunpack.c.h.b16 %v47
    %v284 = vunpack.c.l.b16 %v48
    %v285 = vunpack.c.h.b16 %v48
    %v286 = vunpack.c.l.b16 %v49
    %v287 = vunpack.c.h.b16 %v49
    %v288 = vunpack.c.l.b16 %v50
    %v289 = vunpack.c.h.b16 %v50
    %v290 = vunpack.c.l.b16 %v51
    %v291 = vunpack.c.h.b16 %v51
    %v292 = vunpack.c.l.b16 %v52
    %v293 = vunpack.c.h.b16 %v52
    %v294 = vunpack.c.l.b16 %v53
    %v295 = vunpack.c.h.b16 %v53
    %v296 = vunpack.c.l.b16 %v54
    %v297 = vunpack.c.h.b16 %v54
    %v298 = vunpack.c.l.b16 %v55
    %v299 = vunpack.c.h.b16 %v55
    %v300 = vunpack.c.l.b16 %v56
    %v301 = vunpack.c.h.b16 %v56
    %v302 = vunpack.c.l.b16 %v57
    %v303 = vunpack.c.h.b16 %v57
    %v304 = vunpack.c.l.b16 %v58
    %v305 = vunpack.c.h.b16 %v58
    %v306 = vunpack.c.l.b16 %v59
    %v307 = vunpack.c.h.b16 %v59
    %v308 = vunpack.c.l.b16 %v60
    %v309 = vunpack.c.h.b16 %v60
    %v310 = vunpack.c.l.b16 %v61
    %v311 = vunpack.c.h.b16 %v61
    %v312 = vunpack.c.l.b16 %v62
    %v313 = vunpack.c.h.b16 %v62
    %v314 = vunpack.c.l.b16 %v63
    %v315 = vunpack.c.h.b16 %v63
    %v316 = vunpack.c.l.b16 %v64
    %v317 = vunpack.c.h.b16 %v64
    %v318 = vunpack.c.l.b16 %v65
    %v319 = vunpack.c.h.b16 %v65
    %v320 = vunpack.c.l.b16 %v66
    %v321 = vunpack.c.h.b16 %v66
    %v322 = vunpack.c.l.b16 %v67
    %v323 = vunpack.c.h.b16 %v67
    %v324 = vunpack.c.l.b16 %v68
    %v325 = vunpack.c.h.b16 %v68
    %v326 = vunpack.c.l.b16 %v69
    %v327 = vunpack.c.h.b16 %v69
    %v328 = vunpack.c.l.b16 %v70
    %v329 = vunpack.c.h.b16 %v70
    %v330 = vunpack.c.l.b16 %v71
    %v331 = vunpack.c.h.b16 %v71
    %v332 = vunpack.c.l.b16 %v72
    %v333 = vunpack.c.h.b16 %v72
    %v334 = vunpack.c.l.b16 %v73
    %v335 = vunpack.c.h.b16 %v73
    %v336 = vunpack.c.l.b16 %v74
    %v337 = vunpack.c.h.b16 %v74
    %v338 = vunpack.c.l.b16 %v75
    %v339 = vunpack.c.h.b16 %v75
    %v340 = vunpack.c.l.b16 %v76
    %v341 = vunpack.c.h.b16 %v76
    %v342 = vunpack.c.l.b16 %v77
    %v343 = vunpack.c.h.b16 %v77
    %v344 = vunpack.c.l.b16 %v78
    %v345 = vunpack.c.h.b16 %v78
    %v346 = vunpack.c.l.b16 %v79
    %v347 = vunpack.c.h.b16 %v79
    %v348 = vunpack.c.l.b16 %v80
    %v349 = vunpack.c.h.b16 %v80
    %v350 = vunpack.c.l.b16 %v81
    %v351 = vunpack.c.h.b16 %v81
    %v352 = vunpack.c.l.b16 %v82
    %v353 = vunpack.c.h.b16 %v82
    %v354 = vunpack.c.l.b16 %v83
    %v355 = vunpack.c.h.b16 %v83
    %v356 = vunpack.c.l.b16 %v84
    %v357 = vunpack.c.h.b16 %v84
    %v358 = vunpack.c.l.b16 %v85
    %v359 = vunpack.c.h.b16 %v85
    %v360 = vunpack.c.l.b16 %v86
    %v361 = vunpack.c.h.b16 %v86
    %v362 = vunpack.c.l.b16 %v87
    %v363 = vunpack.c.h.b16 %v87
    %v364 = vunpack.c.l.b16 %v88
    %v365 = vunpack.c.h.b16 %v88
    %v366 = vunpack.c.l.b16 %v89
    %v367 = vunpack.c.h.b16 %v89
    %v368 = vunpack.c.l.b16 %v90
    %v369 = vunpack.c.h.b16 %v90
    %v370 = vunpack.c.l.b16 %v91
    %v371 = vunpack.c.h.b16 %v91
    %v372 = vunpack.c.l.b16 %v92
    %v373 = vunpack.c.h.b16 %v92
    %v374 = vunpack.c.l.b16 %v93
    %v375 = vunpack.c.h.b16 %v93
    %v376 = vunpack.c.l.b16 %v94
    %v377 = vunpack.c.h.b16 %v94
    %v378 = vunpack.c.l.b16 %v95
    %v379 = vunpack.c.h.b16 %v95
    %v380 = vunpack.c.l.b16 %v96
    %v381 = vunpack.c.h.b16 %v96
    %v382 = vunpack.c.l.b16 %v97
    %v383 = vunpack.c.h.b16 %v97
    %v384 = vunpack.c.l.b16 %v98
    %v385 = vunpack.c.h.b16 %v98
    %v386 = vunpack.c.l.b16 %v99
    %v387 = vunpack.c.h.b16 %v99
    %v388 = vunpack.c.l.b16 %v100
    %v389 = vunpack.c.h.b16 %v100
    %v390 = vunpack.c.l.b16 %v101
    %v391 = vunpack.c.h.b16 %v101
    %v392 = vunpack.c.l.b16 %v102
    %v393 = vunpack.c.h.b16 %v102
    %v394 = vunpack.c.l.b16 %v103
    %v395 = vunpack.c.h.b16 %v103
    %v396 = vunpack.c.l.b16 %v104
    %v397 = vunpack.c.h.b16 %v104
    %v398 = vunpack.c.l.b16 %v105
    %v399 = vunpack.c.h.b16 %v105
    %v400 = vunpack.c.l.b16 %v106
    %v401 = vunpack.c.h.b16 %v106
    %v402 = vunpack.c.l.b16 %v107
    %v403 = vunpack.c.h.b16 %v107
    %v404 = vunpack.c.l.b16 %v108
    %v405 = vunpack.c.h.b16 %v108
    %v406 = vunpack.c.l.b16 %v109
    %v407 = vunpack.c.h.b16 %v109
    %v408 = vunpack.c.l.b16 %v110
    %v409 = vunpack.c.h.b16 %v110
    %v410 = vunpack.c.l.b16 %v111
    %v411 = vunpack.c.h.b16 %v111
    %v412 = vunpack.c.l.b16 %v112
    %v413 = vunpack.c.h.b16 %v112
    %v414 = vunpack.c.l.b16 %v113
    %v415 = vunpack.c.h.b16 %v113
    %v416 = vunpack.c.l.b16 %v114
    %v417 = vunpack.c.h.b16 %v114
    %v418 = vunpack.c.l.b16 %v115
    %v419 = vunpack.c.h.b16 %v115
    %v420 = vunpack.c.l.b16 %v116
    %v421 = vunpack.c.h.b16 %v116
    %v422 = vunpack.c.l.b16 %v117
    %v423 = vunpack.c.h.b16 %v117
    %v424 = vunpack.c.l.b16 %v118
    %v425 = vunpack.c.h.b16 %v118
    %v426 = vunpack.c.l.b16 %v119
    %v427 = vunpack.c.h.b16 %v119
    %v428 = vunpack.c.l.b16 %v120
    %v429 = vunpack.c.h.b16 %v120
    %v430 = vunpack.c.l.b16 %v121
    %v431 = vunpack.c.h.b16 %v121
    %v432 = vunpack.c.l.b16 %v122
    %v433 = vunpack.c.h.b16 %v122
    %v434 = vunpack.c.l.b16 %v123
    %v435 = vunpack.c.h.b16 %v123
    %v436 = vunpack.c.l.b16 %v124
    %v437 = vunpack.c.h.b16 %v124
    %v438 = vunpack.c.l.b16 %v125
    %v439 = vunpack.c.h.b16 %v125
    %v440 = vunpack.c.l.b16 %v126
    %v441 = vunpack.c.h.b16 %v126
    %v442 = vunpack.c.l.b16 %v127
    %v443 = vunpack.c.h.b16 %v127
    %v444 = vunpack.c.l.b16 %v128
    %v445 = vunpack.c.h.b16 %v128
    %v446 = vunpack.c.l.b16 %v129
    %v447 = vunpack.c.h.b16 %v129
    %v448 = vunpack.c.l.b16 %v130
    %v449 = vunpack.c.h.b16 %v130
    %v450 = vunpack.c.l.b16 %v131
    %v451 = vunpack.c.h.b16 %v131
    %v452 = vunpack.c.l.b16 %v132
    %v453 = vunpack.c.h.b16 %v132
    %v454 = vunpack.c.l.b16 %v133
    %v455 = vunpack.c.h.b16 %v133
    %v456 = vunpack.c.l.b16 %v134
    %v457 = vunpack.c.h.b16 %v134
    %v458 = vunpack.c.l.b16 %v135
    %v459 = vunpack.c.h.b16 %v135
    %v460 = vunpack.c.l.b16 %v136
    %v461 = vunpack.c.h.b16 %v136
    %v462 = vunpack.c.l.b16 %v137
    %v463 = vunpack.c.h.b16 %v137
    %v464 = vunpack.c.l.b16 %v138
    %v465 = vunpack.c.h.b16 %v138
    %v466 = vunpack.c.l.b16 %v139
    %v467 = vunpack.c.h.b16 %v139
    %v468 = vunpack.c.l.b16 %v140
    %v469 = vunpack.c.h.b16 %v140
    %v470 = vunpack.c.l.b16 %v141
    %v471 = vunpack.c.h.b16 %v141
    %v472 = vpack.c.b16 %v278, %v276
    %v473 = vpack.c.b16 %v279, %v277
    %v474 = vpack.c.b16 %v282, %v280
    %v475 = vpack.c.b16 %v283, %v281
    %v476 = vpack.c.b16 %v286, %v284
    %v477 = vpack.c.b16 %v287, %v285
    %v478 = vpack.c.b16 %v290, %v288
    %v479 = vpack.c.b16 %v291, %v289
    %v480 = vpack.c.b16 %v294, %v292
    %v481 = vpack.c.b16 %v295, %v293
    %v482 = vpack.c.b16 %v298, %v296
    %v483 = vpack.c.b16 %v299, %v297
    %v484 = vpack.c.b16 %v302, %v300
    %v485 = vpack.c.b16 %v303, %v301
    %v486 = vpack.c.b16 %v306, %v304
    %v487 = vpack.c.b16 %v307, %v305
    %v488 = vpack.c.b16 %v310, %v308
    %v489 = vpack.c.b16 %v311, %v309
    %v490 = vpack.c.b16 %v314, %v312
    %v491 = vpack.c.b16 %v315, %v313
    %v492 = vpack.c.b16 %v318, %v316
    %v493 = vpack.c.b16 %v319, %v317
    %v494 = vpack.c.b16 %v322, %v320
    %v495 = vpack.c.b16 %v323, %v321
    %v496 = vpack.c.b16 %v326, %v324
    %v497 = vpack.c.b16 %v327, %v325
    %v498 = vpack.c.b16 %v330, %v328
    %v499 = vpack.c.b16 %v331, %v329
    %v500 = vpack.c.b16 %v334, %v332
    %v501 = vpack.c.b16 %v335, %v333
    %v502 = vpack.c.b16 %v338, %v336
    %v503 = vpack.c.b16 %v339, %v337
    %v504 = vpack.c.b16 %v342, %v340
    %v505 = vpack.c.b16 %v343, %v341
    %v506 = vpack.c.b16 %v346, %v344
    %v507 = vpack.c.b16 %v347, %v345
    %v508 = vpack.c.b16 %v350, %v348
    %v509 = vpack.c.b16 %v351, %v349
    %v510 = vpack.c.b16 %v354, %v352
    %v511 = vpack.c.b16 %v355, %v353
    %v512 = vpack.c.b16 %v358, %v356
    %v513 = vpack.c.b16 %v359, %v357
    %v514 = vpack.c.b16 %v362, %v360
    %v515 = vpack.c.b16 %v363, %v361
    %v516 = vpack.c.b16 %v366, %v364
    %v517 = vpack.c.b16 %v367, %v365
    %v518 = vpack.c.b16 %v370, %v368
    %v519 = vpack.c.b16 %v371, %v369
    %v520 = vpack.c.b16 %v374, %v372
    %v521 = vpack.c.b16 %v375, %v373
    %v522 = vpack.c.b16 %v378, %v376
    %v523 = vpack.c.b16 %v379, %v377
    %v524 = vpack.c.b16 %v382, %v380
    %v525 = vpack.c.b16 %v383, %v381
    %v526 = vpack.c.b16 %v386, %v384
    %v527 = vpack.c.b16 %v387, %v385
    %v528 = vpack.c.b16 %v390, %v388
    %v529 = vpack.c.b16 %v391, %v389
    %v530 = vpack.c.b16 %v394, %v392
    %v531 = vpack.c.b16 %v395, %v393
    %v532 = vpack.c.b16 %v398, %v396
    %v533 = vpack.c.b16 %v399, %v397
    %v534 = vpack.c.b16 %v402, %v400
    %v535 = vpack.c.b16 %v403, %v401
    %v536 = vpack.c.b16 %v406, %v404
    %v537 = vpack.c.b16 %v407, %v405
    %v538 = vpack.c.b16 %v410, %v408
    %v539 = vpack.c.b16 %v411, %v409
    %v540 = vpack.c.b16 %v414, %v412
    %v541 = vpack.c.b16 %v415, %v413
    %v542 = vpack.c.b16 %v418, %v416
    %v543 = vpack.c.b16 %v419, %v417
    %v544 = vpack.c.b16 %v422, %v420
    %v545 = vpack.c.b16 %v423, %v421
    %v546 = vpack.c.b16 %v426, %v424
    %v547 = vpack.c.b16 %v427, %v425
    %v548 = vpack.c.b16 %v430, %v428
    %v549 = vpack.c.b16 %v431, %v429
    %v550 = vpack.c.b16 %v434, %v432
    %v551 = vpack.c.b16 %v435, %v433
    %v552 = vpack.c.b16 %v438, %v436
    %v553 = vpack.c.b16 %v439, %v437
    %v554 = vpack.c.b16 %v442, %v440
    %v555 = vpack.c.b16 %v443, %v441
    %v556 = vpack.c.b16 %v446, %v444
    %v557 = vpack.c.b16 %v447, %v445
    %v558 = vpack.c.b16 %v450, %v448
    %v559 = vpack.c.b16 %v451, %v449
    %v560 = vpack.c.b16 %v454, %v452
    %v561 = vpack.c.b16 %v455, %v453
    %v562 = vpack.c.b16 %v458, %v456
    %v563 = vpack.c.b16 %v459, %v457
    %v564 = vpack.c.b16 %v462, %v460
    %v565 = vpack.c.b16 %v463, %v461
    %v566 = vpack.c.b16 %v466, %v464
    %v567 = vpack.c.b16 %v467, %v465
    %v568 = vpack.c.b16 %v470, %v468
    %v569 = vpack.c.b16 %v471, %v469
    %vm668 = vcmask 130048
    %v670 = vsel %vm668, %v171, 0
    %672 = vmatprep.subr.bf16.mxu0 %v473
    %673 = vmatpush1.bf16.msra.mxu0 %v472
    %674 = vmatprep.subr.bf16.mxu0 %v475
    %675 = vmatpush1.bf16.msra.mxu0 %v474
    %676 = vmatprep.subr.bf16.mxu0 %v477
    %677 = vmatpush1.bf16.msra.mxu0 %v476
    %678 = vmatprep.subr.bf16.mxu0 %v479
    %679 = vmatpush1.bf16.msra.mxu0 %v478
    %680 = vmatprep.subr.bf16.mxu0 %v481
    %681 = vmatpush1.bf16.msra.mxu0 %v480
    %682 = vmatprep.subr.bf16.mxu0 %v483
    %683 = vmatpush1.bf16.msra.mxu0 %v482
    %684 = vmatprep.subr.bf16.mxu0 %v485
    %685 = vmatpush1.bf16.msra.mxu0 %v484
    %686 = vmatprep.subr.bf16.mxu0 %v487
    %687 = vmatpush1.bf16.msra.mxu0 %v486
    %688 = vmatprep.subr.bf16.mxu0 %v489
    %689 = vmatpush1.bf16.msra.mxu0 %v488
    %690 = vmatprep.subr.bf16.mxu0 %v491
    %691 = vmatpush1.bf16.msra.mxu0 %v490
    %692 = vmatprep.subr.bf16.mxu0 %v493
    %693 = vmatpush1.bf16.msra.mxu0 %v492
    %694 = vmatprep.subr.bf16.mxu0 %v495
    %695 = vmatpush1.bf16.msra.mxu0 %v494
    %696 = vmatprep.subr.bf16.mxu0 %v497
    %697 = vmatpush1.bf16.msra.mxu0 %v496
    %698 = vmatprep.subr.bf16.mxu0 %v499
    %699 = vmatpush1.bf16.msra.mxu0 %v498
    %700 = vmatprep.subr.bf16.mxu0 %v501
    %701 = vmatpush1.bf16.msra.mxu0 %v500
    %702 = vmatprep.subr.bf16.mxu0 %v503
    %703 = vmatpush1.bf16.msra.mxu0 %v502
    %704 = vmatprep.mubr.bf16.mxu0 %v166
    %705 = vmatmul.mubr.bf16.gmra.mrb[0].mxu0 %v165
    %v706 = vpop.f32.mrb[0].mxu0
    %v707 = vadd.f32 %v147, %v706
    %v708 = vpop.f32.mrb[0].mxu0
    %v709 = vadd.f32 %v151, %v708
    %v710 = vpop.f32.mrb[0].mxu0
    %v711 = vpop.f32.mrb[0].mxu0
    %712 = vdwg.mxu0
    %713 = vmatprep.subr.bf16.mxu0 %v505
    %714 = vmatpush1.bf16.msra.mxu0 %v504
    %715 = vmatprep.subr.bf16.mxu0 %v507
    %716 = vmatpush1.bf16.msra.mxu0 %v506
    %717 = vmatprep.subr.bf16.mxu0 %v509
    %718 = vmatpush1.bf16.msra.mxu0 %v508
    %719 = vmatprep.subr.bf16.mxu0 %v511
    %720 = vmatpush1.bf16.msra.mxu0 %v510
    %721 = vmatprep.subr.bf16.mxu0 %v513
    %722 = vmatpush1.bf16.msra.mxu0 %v512
    %723 = vmatprep.subr.bf16.mxu0 %v515
    %724 = vmatpush1.bf16.msra.mxu0 %v514
    %725 = vmatprep.subr.bf16.mxu0 %v517
    %726 = vmatpush1.bf16.msra.mxu0 %v516
    %727 = vmatprep.subr.bf16.mxu0 %v519
    %728 = vmatpush1.bf16.msra.mxu0 %v518
    %729 = vmatprep.subr.bf16.mxu0 %v521
    %730 = vmatpush1.bf16.msra.mxu0 %v520
    %731 = vmatprep.subr.bf16.mxu0 %v523
    %732 = vmatpush1.bf16.msra.mxu0 %v522
    %733 = vmatprep.subr.bf16.mxu0 %v525
    %734 = vmatpush1.bf16.msra.mxu0 %v524
    %735 = vmatprep.subr.bf16.mxu0 %v527
    %736 = vmatpush1.bf16.msra.mxu0 %v526
    %737 = vmatprep.subr.bf16.mxu0 %v529
    %738 = vmatpush1.bf16.msra.mxu0 %v528
    %739 = vmatprep.subr.bf16.mxu0 %v531
    %740 = vmatpush1.bf16.msra.mxu0 %v530
    %741 = vmatprep.subr.bf16.mxu0 %v533
    %742 = vmatpush1.bf16.msra.mxu0 %v532
    %743 = vmatprep.subr.bf16.mxu0 %v535
    %744 = vmatpush1.bf16.msra.mxu0 %v534
    %745 = vmatprep.mubr.bf16.mxu0 %v168
    %746 = vmatmul.mubr.bf16.gmra.mrb[0].mxu0 %v167
    %v747 = vpop.f32.mrb[0].mxu0
    %v748 = vadd.f32 %v707, %v747
    %v749 = vpop.f32.mrb[0].mxu0
    %v750 = vadd.f32 %v709, %v749
    %v751 = vpop.f32.mrb[0].mxu0
    %v752 = vpop.f32.mrb[0].mxu0
    %753 = vdwg.mxu0
    %754 = vmatprep.subr.bf16.mxu0 %v537
    %755 = vmatpush1.bf16.msra.mxu0 %v536
    %756 = vmatprep.subr.bf16.mxu0 %v539
    %757 = vmatpush1.bf16.msra.mxu0 %v538
    %758 = vmatprep.subr.bf16.mxu0 %v541
    %759 = vmatpush1.bf16.msra.mxu0 %v540
    %760 = vmatprep.subr.bf16.mxu0 %v543
    %761 = vmatpush1.bf16.msra.mxu0 %v542
    %762 = vmatprep.subr.bf16.mxu0 %v545
    %763 = vmatpush1.bf16.msra.mxu0 %v544
    %764 = vmatprep.subr.bf16.mxu0 %v547
    %765 = vmatpush1.bf16.msra.mxu0 %v546
    %766 = vmatprep.subr.bf16.mxu0 %v549
    %767 = vmatpush1.bf16.msra.mxu0 %v548
    %768 = vmatprep.subr.bf16.mxu0 %v551
    %769 = vmatpush1.bf16.msra.mxu0 %v550
    %770 = vmatprep.subr.bf16.mxu0 %v553
    %771 = vmatpush1.bf16.msra.mxu0 %v552
    %772 = vmatprep.subr.bf16.mxu0 %v555
    %773 = vmatpush1.bf16.msra.mxu0 %v554
    %774 = vmatprep.subr.bf16.mxu0 %v557
    %775 = vmatpush1.bf16.msra.mxu0 %v556
    %776 = vmatprep.subr.bf16.mxu0 %v559
    %777 = vmatpush1.bf16.msra.mxu0 %v558
    %778 = vmatprep.subr.bf16.mxu0 %v561
    %779 = vmatpush1.bf16.msra.mxu0 %v560
    %780 = vmatprep.subr.bf16.mxu0 %v563
    %781 = vmatpush1.bf16.msra.mxu0 %v562
    %782 = vmatprep.subr.bf16.mxu0 %v565
    %783 = vmatpush1.bf16.msra.mxu0 %v564
    %784 = vmatprep.subr.bf16.mxu0 %v567
    %785 = vmatpush1.bf16.msra.mxu0 %v566
    %786 = vmatprep.mubr.bf16.mxu0 %v170
    %787 = vmatmul.mubr.bf16.gmra.mrb[0].mxu0 %v169
    %v788 = vpop.f32.mrb[0].mxu0
    %v789 = vadd.f32 %v748, %v788
    %v790 = vpop.f32.mrb[0].mxu0
    %v791 = vadd.f32 %v750, %v790
    %v792 = vpop.f32.mrb[0].mxu0
    %v793 = vpop.f32.mrb[0].mxu0
    %794 = vdwg.mxu0
    %795 = vmatprep.subr.bf16.mxu0 %v569
    %796 = vmatpush1.bf16.msra.mxu0 %v568
    %797 = vmatprep.subr.bf16.mxu0 0
    %798 = vmatpush1.bf16.msra.mxu0 0
    %799 = vmatprep.subr.bf16.mxu0 0
    %800 = vmatpush1.bf16.msra.mxu0 0
    %801 = vmatprep.subr.bf16.mxu0 0
    %802 = vmatpush1.bf16.msra.mxu0 0
    %803 = vmatprep.subr.bf16.mxu0 0
    %804 = vmatpush1.bf16.msra.mxu0 0
    %805 = vmatprep.subr.bf16.mxu0 0
    %806 = vmatpush1.bf16.msra.mxu0 0
    %807 = vmatprep.subr.bf16.mxu0 0
    %808 = vmatpush1.bf16.msra.mxu0 0
    %809 = vmatprep.subr.bf16.mxu0 0
    %810 = vmatpush1.bf16.msra.mxu0 0
    %811 = vmatprep.subr.bf16.mxu0 0
    %812 = vmatpush1.bf16.msra.mxu0 0
    %813 = vmatprep.subr.bf16.mxu0 0
    %814 = vmatpush1.bf16.msra.mxu0 0
    %815 = vmatprep.subr.bf16.mxu0 0
    %816 = vmatpush1.bf16.msra.mxu0 0
    %817 = vmatprep.subr.bf16.mxu0 0
    %818 = vmatpush1.bf16.msra.mxu0 0
    %819 = vmatprep.subr.bf16.mxu0 0
    %820 = vmatpush1.bf16.msra.mxu0 0
    %821 = vmatprep.subr.bf16.mxu0 0
    %822 = vmatpush1.bf16.msra.mxu0 0
    %823 = vmatprep.subr.bf16.mxu0 0
    %824 = vmatpush1.bf16.msra.mxu0 0
    %825 = vmatprep.subr.bf16.mxu0 0
    %826 = vmatpush1.bf16.msra.mxu0 0
    %827 = vmatprep.mubr.bf16.mxu0 0
    %828 = vmatmul.mubr.bf16.gmra.mrb[0].mxu0 %v670
    %v829 = vpop.f32.mrb[0].mxu0
    %v830 = vadd.f32 %v789, %v829
    %v831 = vpop.f32.mrb[0].mxu0
    %v832 = vadd.f32 %v791, %v831
    %v833 = vpop.f32.mrb[0].mxu0
    %v834 = vpop.f32.mrb[0].mxu0
    %835 = vdwg.mxu0
    %v836 = vmax.f32 %v830, 0.0
    %v837 = vmax.f32 %v832, 0.0
    %v838 = vpack.c.bf16 %v836, %v836
    %v839 = vpack.c.bf16 %v837, %v837
    %v840 = vld [vmem:[%s3] sm:$0xf]
    %v841 = vld [vmem:[%s3 + $0x4] sm:$0xf]
    %v842 = vld [vmem:[%s3 + $0x8] sm:$0xf]
    %v843 = vld [vmem:[%s3 + $0xc] sm:$0xf]
    %v844 = vld [vmem:[%s3 + $0x10] sm:$0xf]
    %v845 = vld [vmem:[%s3 + $0x14] sm:$0xf]
    %v846 = vld [vmem:[%s3 + $0x18] sm:$0xf]
    %v847 = vld [vmem:[%s3 + $0x1c] sm:$0xf]
    %v848 = vld [vmem:[%s3 + $0x20] sm:$0xf]
    %v849 = vld [vmem:[%s3 + $0x24] sm:$0xf]
    %v850 = vld [vmem:[%s3 + $0x28] sm:$0xf]
    %v851 = vld [vmem:[%s3 + $0x2c] sm:$0xf]
    %v852 = vld [vmem:[%s3 + $0x30] sm:$0xf]
    %v853 = vld [vmem:[%s3 + $0x34] sm:$0xf]
    %v854 = vld [vmem:[%s3 + $0x38] sm:$0xf]
    %v855 = vld [vmem:[%s3 + $0x3c] sm:$0xf]
    %v856 = vld [vmem:[%s3 + $0x40] sm:$0xf]
    %v857 = vld [vmem:[%s3 + $0x44] sm:$0xf]
    %v858 = vld [vmem:[%s3 + $0x48] sm:$0xf]
    %v859 = vld [vmem:[%s3 + $0x4c] sm:$0xf]
    %v860 = vld [vmem:[%s3 + $0x50] sm:$0xf]
    %v861 = vld [vmem:[%s3 + $0x54] sm:$0xf]
    %v862 = vld [vmem:[%s3 + $0x58] sm:$0xf]
    %v863 = vld [vmem:[%s3 + $0x5c] sm:$0xf]
    %v864 = vld [vmem:[%s3 + $0x60] sm:$0xf]
    %v865 = vld [vmem:[%s3 + $0x64] sm:$0xf]
    %v866 = vld [vmem:[%s3 + $0x68] sm:$0xf]
    %v867 = vld [vmem:[%s3 + $0x6c] sm:$0xf]
    %v868 = vld [vmem:[%s3 + $0x70] sm:$0xf]
    %v869 = vld [vmem:[%s3 + $0x74] sm:$0xf]
    %v870 = vld [vmem:[%s3 + $0x78] sm:$0xf]
    %v871 = vld [vmem:[%s3 + $0x7c] sm:$0xf]
    %v872 = vld [vmem:[%s4] sm:$0x1]
    %v874 = vlaneseq
    %v875 = vshrl.u32 %v874, 7
    %v876 = vsub.s32 0, %v875
    %v877 = vrot.slane %v872, %v876
    %v911 = vunpack.c.l.b16 %v840
    %v912 = vunpack.c.l.b16 %v841
    %v913 = vunpack.c.l.b16 %v842
    %v914 = vunpack.c.l.b16 %v843
    %v915 = vunpack.c.l.b16 %v844
    %v916 = vunpack.c.l.b16 %v845
    %v917 = vunpack.c.l.b16 %v846
    %v918 = vunpack.c.l.b16 %v847
    %v919 = vunpack.c.l.b16 %v848
    %v920 = vunpack.c.l.b16 %v849
    %v921 = vunpack.c.l.b16 %v850
    %v922 = vunpack.c.l.b16 %v851
    %v923 = vunpack.c.l.b16 %v852
    %v924 = vunpack.c.l.b16 %v853
    %v925 = vunpack.c.l.b16 %v854
    %v926 = vunpack.c.l.b16 %v855
    %v927 = vunpack.c.l.b16 %v856
    %v928 = vunpack.c.l.b16 %v857
    %v929 = vunpack.c.l.b16 %v858
    %v930 = vunpack.c.l.b16 %v859
    %v931 = vunpack.c.l.b16 %v860
    %v932 = vunpack.c.l.b16 %v861
    %v933 = vunpack.c.l.b16 %v862
    %v934 = vunpack.c.l.b16 %v863
    %v935 = vunpack.c.l.b16 %v864
    %v936 = vunpack.c.l.b16 %v865
    %v937 = vunpack.c.l.b16 %v866
    %v938 = vunpack.c.l.b16 %v867
    %v939 = vunpack.c.l.b16 %v868
    %v940 = vunpack.c.l.b16 %v869
    %v941 = vunpack.c.l.b16 %v870
    %v942 = vunpack.c.l.b16 %v871
    %v943 = vpack.c.b16 %v912, %v911
    %v944 = vpack.c.b16 %v914, %v913
    %v945 = vpack.c.b16 %v916, %v915
    %v946 = vpack.c.b16 %v918, %v917
    %v947 = vpack.c.b16 %v920, %v919
    %v948 = vpack.c.b16 %v922, %v921
    %v949 = vpack.c.b16 %v924, %v923
    %v950 = vpack.c.b16 %v926, %v925
    %v951 = vpack.c.b16 %v928, %v927
    %v952 = vpack.c.b16 %v930, %v929
    %v953 = vpack.c.b16 %v932, %v931
    %v954 = vpack.c.b16 %v934, %v933
    %v955 = vpack.c.b16 %v936, %v935
    %v956 = vpack.c.b16 %v938, %v937
    %v957 = vpack.c.b16 %v940, %v939
    %v958 = vpack.c.b16 %v942, %v941
    %975 = vmatprep.subr.bf16.mxu0 0
    %976 = vmatpush1.bf16.msra.mxu0 %v943
    %977 = vmatprep.subr.bf16.mxu0 0
    %978 = vmatpush1.bf16.msra.mxu0 %v944
    %979 = vmatprep.subr.bf16.mxu0 0
    %980 = vmatpush1.bf16.msra.mxu0 %v945
    %981 = vmatprep.subr.bf16.mxu0 0
    %982 = vmatpush1.bf16.msra.mxu0 %v946
    %983 = vmatprep.subr.bf16.mxu0 0
    %984 = vmatpush1.bf16.msra.mxu0 %v947
    %985 = vmatprep.subr.bf16.mxu0 0
    %986 = vmatpush1.bf16.msra.mxu0 %v948
    %987 = vmatprep.subr.bf16.mxu0 0
    %988 = vmatpush1.bf16.msra.mxu0 %v949
    %989 = vmatprep.subr.bf16.mxu0 0
    %990 = vmatpush1.bf16.msra.mxu0 %v950
    %991 = vmatprep.subr.bf16.mxu0 0
    %992 = vmatpush1.bf16.msra.mxu0 %v951
    %993 = vmatprep.subr.bf16.mxu0 0
    %994 = vmatpush1.bf16.msra.mxu0 %v952
    %995 = vmatprep.subr.bf16.mxu0 0
    %996 = vmatpush1.bf16.msra.mxu0 %v953
    %997 = vmatprep.subr.bf16.mxu0 0
    %998 = vmatpush1.bf16.msra.mxu0 %v954
    %999 = vmatprep.subr.bf16.mxu0 0
    %1000 = vmatpush1.bf16.msra.mxu0 %v955
    %1001 = vmatprep.subr.bf16.mxu0 0
    %1002 = vmatpush1.bf16.msra.mxu0 %v956
    %1003 = vmatprep.subr.bf16.mxu0 0
    %1004 = vmatpush1.bf16.msra.mxu0 %v957
    %1005 = vmatprep.subr.bf16.mxu0 0
    %1006 = vmatpush1.bf16.msra.mxu0 %v958
    %1007 = vmatprep.mubr.bf16.mxu0 %v839
    %1008 = vmatmul.mubr.bf16.gmra.mrb[0].mxu0 %v838
    %v1009 = vpop.f32.mrb[0].mxu0
    %v1010 = vadd.f32 %v877, %v1009
    %v1011 = vpop.f32.mrb[0].mxu0
    %v1012 = vpop.f32.mrb[0].mxu0
    %v1013 = vpop.f32.mrb[0].mxu0
    %1014 = vdwg.mxu0
    %vm1015 = vcmask 261120
    %1016 = vst.msk [vmem:[#allocation4] sm:$0xff] %vm1015, %v1010
    %v1017 = vld [vmem:[%s9] sm:$0xff]
    %v1018 = vmul.f32 %v1010, 0.5
    %v1019 = vmul.f32 %v1018, 1.442695
    %v1020 = vpow.pop %v1019
    %1022 = vrot.lane.b32.xlu0 %v1020, 112
    %v1023 = vpop.permute.xlu0 %1022
    %v1025 = vmul.f32 %v1017, %v1023
    %v1026 = vadd.f32 %v1010, %v1025
    %v1027 = vpack.c.bf16 %v1026, %v1026
    %v1028 = vld [vmem:[%s5] sm:$0xff]
    %v1029 = vld [vmem:[%s5 + $0x8] sm:$0xff]
    %v1030 = vld [vmem:[%s6] sm:$0x3]
    %v1032 = vlaneseq
    %v1033 = vshrl.u32 %v1032, 7
    %v1034 = vsub.s32 0, %v1033
    %v1035 = vrot.slane %v1030, %v1034
    %v1036 = vlaneseq
    %v1037 = vshrl.u32 %v1036, 7
    %v1038 = vsub.s32 1, %v1037
    %v1039 = vrot.slane %v1030, %v1038
    %v1044 = vunpack.c.l.b16 %v1028
    %v1045 = vunpack.c.h.b16 %v1028
    %v1046 = vunpack.c.l.b16 %v1029
    %v1047 = vunpack.c.h.b16 %v1029
    %v1048 = vpack.c.b16 %v1046, %v1044
    %v1049 = vpack.c.b16 %v1047, %v1045
    %v1053 = vsel %vm668, %v1027, 0
    %1055 = vmatprep.subr.bf16.mxu0 %v1049
    %1056 = vmatpush1.bf16.msra.mxu0 %v1048
    %1057 = vmatprep.subr.bf16.mxu0 0
    %1058 = vmatpush1.bf16.msra.mxu0 0
    %1059 = vmatprep.subr.bf16.mxu0 0
    %1060 = vmatpush1.bf16.msra.mxu0 0
    %1061 = vmatprep.subr.bf16.mxu0 0
    %1062 = vmatpush1.bf16.msra.mxu0 0
    %1063 = vmatprep.subr.bf16.mxu0 0
    %1064 = vmatpush1.bf16.msra.mxu0 0
    %1065 = vmatprep.subr.bf16.mxu0 0
    %1066 = vmatpush1.bf16.msra.mxu0 0
    %1067 = vmatprep.subr.bf16.mxu0 0
    %1068 = vmatpush1.bf16.msra.mxu0 0
    %1069 = vmatprep.subr.bf16.mxu0 0
    %1070 = vmatpush1.bf16.msra.mxu0 0
    %1071 = vmatprep.subr.bf16.mxu0 0
    %1072 = vmatpush1.bf16.msra.mxu0 0
    %1073 = vmatprep.subr.bf16.mxu0 0
    %1074 = vmatpush1.bf16.msra.mxu0 0
    %1075 = vmatprep.subr.bf16.mxu0 0
    %1076 = vmatpush1.bf16.msra.mxu0 0
    %1077 = vmatprep.subr.bf16.mxu0 0
    %1078 = vmatpush1.bf16.msra.mxu0 0
    %1079 = vmatprep.subr.bf16.mxu0 0
    %1080 = vmatpush1.bf16.msra.mxu0 0
    %1081 = vmatprep.subr.bf16.mxu0 0
    %1082 = vmatpush1.bf16.msra.mxu0 0
    %1083 = vmatprep.subr.bf16.mxu0 0
    %1084 = vmatpush1.bf16.msra.mxu0 0
    %1085 = vmatprep.subr.bf16.mxu0 0
    %1086 = vmatpush1.bf16.msra.mxu0 0
    %1087 = vmatprep.mubr.bf16.mxu0 0
    %1088 = vmatmul.mubr.bf16.gmra.mrb[0].mxu0 %v1053
    %v1089 = vpop.f32.mrb[0].mxu0
    %v1090 = vadd.f32 %v1035, %v1089
    %v1091 = vpop.f32.mrb[0].mxu0
    %v1092 = vadd.f32 %v1039, %v1091
    %v1093 = vpop.f32.mrb[0].mxu0
    %v1094 = vpop.f32.mrb[0].mxu0
    %1095 = vdwg.mxu0
    %v1096 = vmax.f32 %v1090, 0.0
    %v1097 = vmax.f32 %v1092, 0.0
    %v1098 = vpack.c.bf16 %v1096, %v1096
    %v1099 = vpack.c.bf16 %v1097, %v1097
    %v1100 = vld [vmem:[%s7] sm:$0xff]
    %v1101 = vld [vmem:[%s7 + $0x8] sm:$0xff]
    %v1102 = vld [vmem:[%s7 + $0x10] sm:$0xff]
    %v1103 = vld [vmem:[%s7 + $0x18] sm:$0xf]
    %v1104 = vld [vmem:[%s7 + $0x1c] sm:$0xff]
    %v1105 = vld [vmem:[%s7 + $0x24] sm:$0xff]
    %v1106 = vld [vmem:[%s7 + $0x2c] sm:$0xff]
    %v1107 = vld [vmem:[%s7 + $0x34] sm:$0xf]
    %v1108 = vld [vmem:[%s7 + $0x38] sm:$0xff]
    %v1109 = vld [vmem:[%s7 + $0x40] sm:$0xff]
    %v1110 = vld [vmem:[%s7 + $0x48] sm:$0xff]
    %v1111 = vld [vmem:[%s7 + $0x50] sm:$0xf]
    %v1112 = vld [vmem:[%s7 + $0x54] sm:$0xff]
    %v1113 = vld [vmem:[%s7 + $0x5c] sm:$0xff]
    %v1114 = vld [vmem:[%s7 + $0x64] sm:$0xff]
    %v1115 = vld [vmem:[%s7 + $0x6c] sm:$0xf]
    %v1116 = vld [vmem:[%s7 + $0x70] sm:$0xff]
    %v1117 = vld [vmem:[%s7 + $0x78] sm:$0xff]
    %v1118 = vld [vmem:[%s7 + $0x80] sm:$0xff]
    %v1119 = vld [vmem:[%s7 + $0x88] sm:$0xf]
    %v1120 = vld [vmem:[%s7 + $0x8c] sm:$0xff]
    %v1121 = vld [vmem:[%s7 + $0x94] sm:$0xff]
    %v1122 = vld [vmem:[%s7 + $0x9c] sm:$0xff]
    %v1123 = vld [vmem:[%s7 + $0xa4] sm:$0xf]
    %v1124 = vld [vmem:[%s7 + $0xa8] sm:$0xff]
    %v1125 = vld [vmem:[%s7 + $0xb0] sm:$0xff]
    %v1126 = vld [vmem:[%s7 + $0xb8] sm:$0xff]
    %v1127 = vld [vmem:[%s7 + $0xc0] sm:$0xf]
    %v1128 = vld [vmem:[%s7 + $0xc4] sm:$0xff]
    %v1129 = vld [vmem:[%s7 + $0xcc] sm:$0xff]
    %v1130 = vld [vmem:[%s7 + $0xd4] sm:$0xff]
    %v1131 = vld [vmem:[%s7 + $0xdc] sm:$0xf]
    %v1132 = vld [vmem:[%s7 + $0xe0] sm:$0xff]
    %v1133 = vld [vmem:[%s7 + $0xe8] sm:$0xff]
    %v1134 = vld [vmem:[%s7 + $0xf0] sm:$0xff]
    %v1135 = vld [vmem:[%s7 + $0xf8] sm:$0xf]
    %v1136 = vld [vmem:[%s7 + $0xfc] sm:$0xff]
    %v1137 = vld [vmem:[%s7 + $0x104] sm:$0xff]
    %v1138 = vld [vmem:[%s7 + $0x10c] sm:$0xff]
    %v1139 = vld [vmem:[%s7 + $0x114] sm:$0xf]
    %v1140 = vld [vmem:[%s7 + $0x118] sm:$0xff]
    %v1141 = vld [vmem:[%s7 + $0x120] sm:$0xff]
    %v1142 = vld [vmem:[%s7 + $0x128] sm:$0xff]
    %v1143 = vld [vmem:[%s7 + $0x130] sm:$0xf]
    %v1144 = vld [vmem:[%s7 + $0x134] sm:$0xff]
    %v1145 = vld [vmem:[%s7 + $0x13c] sm:$0xff]
    %v1146 = vld [vmem:[%s7 + $0x144] sm:$0xff]
    %v1147 = vld [vmem:[%s7 + $0x14c] sm:$0xf]
    %v1148 = vld [vmem:[%s7 + $0x150] sm:$0xff]
    %v1149 = vld [vmem:[%s7 + $0x158] sm:$0xff]
    %v1150 = vld [vmem:[%s7 + $0x160] sm:$0xff]
    %v1151 = vld [vmem:[%s7 + $0x168] sm:$0xf]
    %v1152 = vld [vmem:[%s7 + $0x16c] sm:$0xff]
    %v1153 = vld [vmem:[%s7 + $0x174] sm:$0xff]
    %v1154 = vld [vmem:[%s7 + $0x17c] sm:$0xff]
    %v1155 = vld [vmem:[%s7 + $0x184] sm:$0xf]
    %v1156 = vld [vmem:[%s7 + $0x188] sm:$0xff]
    %v1157 = vld [vmem:[%s7 + $0x190] sm:$0xff]
    %v1158 = vld [vmem:[%s7 + $0x198] sm:$0xff]
    %v1159 = vld [vmem:[%s7 + $0x1a0] sm:$0xf]
    %v1160 = vld [vmem:[%s7 + $0x1a4] sm:$0xff]
    %v1161 = vld [vmem:[%s7 + $0x1ac] sm:$0xff]
    %v1162 = vld [vmem:[%s7 + $0x1b4] sm:$0xff]
    %v1163 = vld [vmem:[%s7 + $0x1bc] sm:$0xf]
    %v1164 = vld [vmem:[%s7 + $0x1c0] sm:$0xff]
    %v1165 = vld [vmem:[%s7 + $0x1c8] sm:$0xff]
    %v1166 = vld [vmem:[%s7 + $0x1d0] sm:$0xff]
    %v1167 = vld [vmem:[%s7 + $0x1d8] sm:$0xf]
    %v1168 = vld [vmem:[%s7 + $0x1dc] sm:$0xff]
    %v1169 = vld [vmem:[%s7 + $0x1e4] sm:$0xff]
    %v1170 = vld [vmem:[%s7 + $0x1ec] sm:$0xff]
    %v1171 = vld [vmem:[%s7 + $0x1f4] sm:$0xf]
    %v1172 = vld [vmem:[%s7 + $0x1f8] sm:$0xff]
    %v1173 = vld [vmem:[%s7 + $0x200] sm:$0xff]
    %v1174 = vld [vmem:[%s7 + $0x208] sm:$0xff]
    %v1175 = vld [vmem:[%s7 + $0x210] sm:$0xf]
    %v1176 = vld [vmem:[%s7 + $0x214] sm:$0xff]
    %v1177 = vld [vmem:[%s7 + $0x21c] sm:$0xff]
    %v1178 = vld [vmem:[%s7 + $0x224] sm:$0xff]
    %v1179 = vld [vmem:[%s7 + $0x22c] sm:$0xf]
    %v1180 = vld [vmem:[%s7 + $0x230] sm:$0xff]
    %v1181 = vld [vmem:[%s7 + $0x238] sm:$0xff]
    %v1182 = vld [vmem:[%s7 + $0x240] sm:$0xff]
    %v1183 = vld [vmem:[%s7 + $0x248] sm:$0xf]
    %v1184 = vld [vmem:[%s7 + $0x24c] sm:$0xff]
    %v1185 = vld [vmem:[%s7 + $0x254] sm:$0xff]
    %v1186 = vld [vmem:[%s7 + $0x25c] sm:$0xff]
    %v1187 = vld [vmem:[%s7 + $0x264] sm:$0xf]
    %v1188 = vld [vmem:[%s7 + $0x268] sm:$0xff]
    %v1189 = vld [vmem:[%s7 + $0x270] sm:$0xff]
    %v1190 = vld [vmem:[%s7 + $0x278] sm:$0xff]
    %v1191 = vld [vmem:[%s7 + $0x280] sm:$0xf]
    %v1192 = vld [vmem:[%s7 + $0x284] sm:$0xff]
    %v1193 = vld [vmem:[%s7 + $0x28c] sm:$0xff]
    %v1194 = vld [vmem:[%s7 + $0x294] sm:$0xff]
    %v1195 = vld [vmem:[%s7 + $0x29c] sm:$0xf]
    %v1196 = vld [vmem:[%s7 + $0x2a0] sm:$0xff]
    %v1197 = vld [vmem:[%s7 + $0x2a8] sm:$0xff]
    %v1198 = vld [vmem:[%s7 + $0x2b0] sm:$0xff]
    %v1199 = vld [vmem:[%s7 + $0x2b8] sm:$0xf]
    %v1200 = vld [vmem:[%s7 + $0x2bc] sm:$0xff]
    %v1201 = vld [vmem:[%s7 + $0x2c4] sm:$0xff]
    %v1202 = vld [vmem:[%s7 + $0x2cc] sm:$0xff]
    %v1203 = vld [vmem:[%s7 + $0x2d4] sm:$0xf]
    %v1204 = vld [vmem:[%s7 + $0x2d8] sm:$0xff]
    %v1205 = vld [vmem:[%s7 + $0x2e0] sm:$0xff]
    %v1206 = vld [vmem:[%s7 + $0x2e8] sm:$0xff]
    %v1207 = vld [vmem:[%s7 + $0x2f0] sm:$0xf]
    %v1208 = vld [vmem:[%s7 + $0x2f4] sm:$0xff]
    %v1209 = vld [vmem:[%s7 + $0x2fc] sm:$0xff]
    %v1210 = vld [vmem:[%s7 + $0x304] sm:$0xff]
    %v1211 = vld [vmem:[%s7 + $0x30c] sm:$0xf]
    %v1212 = vld [vmem:[%s7 + $0x310] sm:$0xff]
    %v1213 = vld [vmem:[%s7 + $0x318] sm:$0xff]
    %v1214 = vld [vmem:[%s7 + $0x320] sm:$0xff]
    %v1215 = vld [vmem:[%s7 + $0x328] sm:$0xf]
    %v1216 = vld [vmem:[%s7 + $0x32c] sm:$0xff]
    %v1217 = vld [vmem:[%s7 + $0x334] sm:$0xff]
    %v1218 = vld [vmem:[%s7 + $0x33c] sm:$0xff]
    %v1219 = vld [vmem:[%s7 + $0x344] sm:$0xf]
    %v1220 = vld [vmem:[%s7 + $0x348] sm:$0xff]
    %v1221 = vld [vmem:[%s7 + $0x350] sm:$0xff]
    %v1222 = vld [vmem:[%s7 + $0x358] sm:$0xff]
    %v1223 = vld [vmem:[%s7 + $0x360] sm:$0xf]
    %v1224 = vld [vmem:[%s7 + $0x364] sm:$0xff]
    %v1225 = vld [vmem:[%s7 + $0x36c] sm:$0xff]
    %v1226 = vld [vmem:[%s7 + $0x374] sm:$0xff]
    %v1227 = vld [vmem:[%s7 + $0x37c] sm:$0xf]
    %v1228 = vld [vmem:[%s8] sm:$0x7f]
    %v1230 = vlaneseq
    %v1231 = vshrl.u32 %v1230, 7
    %v1232 = vsub.s32 0, %v1231
    %v1233 = vrot.slane %v1228, %v1232
    %v1234 = vlaneseq
    %v1235 = vshrl.u32 %v1234, 7
    %v1236 = vsub.s32 1, %v1235
    %v1237 = vrot.slane %v1228, %v1236
    %v1238 = vlaneseq
    %v1239 = vshrl.u32 %v1238, 7
    %v1240 = vsub.s32 2, %v1239
    %v1241 = vrot.slane %v1228, %v1240
    %v1242 = vlaneseq
    %v1243 = vshrl.u32 %v1242, 7
    %v1244 = vsub.s32 3, %v1243
    %v1245 = vrot.slane %v1228, %v1244
    %v1246 = vlaneseq
    %v1247 = vshrl.u32 %v1246, 7
    %v1248 = vsub.s32 4, %v1247
    %v1249 = vrot.slane %v1228, %v1248
    %v1250 = vlaneseq
    %v1251 = vshrl.u32 %v1250, 7
    %v1252 = vsub.s32 5, %v1251
    %v1253 = vrot.slane %v1228, %v1252
    %v1254 = vlaneseq
    %v1255 = vshrl.u32 %v1254, 7
    %v1256 = vsub.s32 6, %v1255
    %v1257 = vrot.slane %v1228, %v1256
    %v1393 = vunpack.c.l.b16 %v1100
    %v1394 = vunpack.c.h.b16 %v1100
    %v1395 = vunpack.c.l.b16 %v1101
    %v1396 = vunpack.c.h.b16 %v1101
    %v1397 = vunpack.c.l.b16 %v1102
    %v1398 = vunpack.c.h.b16 %v1102
    %v1399 = vunpack.c.l.b16 %v1103
    %v1400 = vunpack.c.l.b16 %v1104
    %v1401 = vunpack.c.h.b16 %v1104
    %v1402 = vunpack.c.l.b16 %v1105
    %v1403 = vunpack.c.h.b16 %v1105
    %v1404 = vunpack.c.l.b16 %v1106
    %v1405 = vunpack.c.h.b16 %v1106
    %v1406 = vunpack.c.l.b16 %v1107
    %v1407 = vunpack.c.l.b16 %v1108
    %v1408 = vunpack.c.h.b16 %v1108
    %v1409 = vunpack.c.l.b16 %v1109
    %v1410 = vunpack.c.h.b16 %v1109
    %v1411 = vunpack.c.l.b16 %v1110
    %v1412 = vunpack.c.h.b16 %v1110
    %v1413 = vunpack.c.l.b16 %v1111
    %v1414 = vunpack.c.l.b16 %v1112
    %v1415 = vunpack.c.h.b16 %v1112
    %v1416 = vunpack.c.l.b16 %v1113
    %v1417 = vunpack.c.h.b16 %v1113
    %v1418 = vunpack.c.l.b16 %v1114
    %v1419 = vunpack.c.h.b16 %v1114
    %v1420 = vunpack.c.l.b16 %v1115
    %v1421 = vunpack.c.l.b16 %v1116
    %v1422 = vunpack.c.h.b16 %v1116
    %v1423 = vunpack.c.l.b16 %v1117
    %v1424 = vunpack.c.h.b16 %v1117
    %v1425 = vunpack.c.l.b16 %v1118
    %v1426 = vunpack.c.h.b16 %v1118
    %v1427 = vunpack.c.l.b16 %v1119
    %v1428 = vunpack.c.l.b16 %v1120
    %v1429 = vunpack.c.h.b16 %v1120
    %v1430 = vunpack.c.l.b16 %v1121
    %v1431 = vunpack.c.h.b16 %v1121
    %v1432 = vunpack.c.l.b16 %v1122
    %v1433 = vunpack.c.h.b16 %v1122
    %v1434 = vunpack.c.l.b16 %v1123
    %v1435 = vunpack.c.l.b16 %v1124
    %v1436 = vunpack.c.h.b16 %v1124
    %v1437 = vunpack.c.l.b16 %v1125
    %v1438 = vunpack.c.h.b16 %v1125
    %v1439 = vunpack.c.l.b16 %v1126
    %v1440 = vunpack.c.h.b16 %v1126
    %v1441 = vunpack.c.l.b16 %v1127
    %v1442 = vunpack.c.l.b16 %v1128
    %v1443 = vunpack.c.h.b16 %v1128
    %v1444 = vunpack.c.l.b16 %v1129
    %v1445 = vunpack.c.h.b16 %v1129
    %v1446 = vunpack.c.l.b16 %v1130
    %v1447 = vunpack.c.h.b16 %v1130
    %v1448 = vunpack.c.l.b16 %v1131
    %v1449 = vunpack.c.l.b16 %v1132
    %v1450 = vunpack.c.h.b16 %v1132
    %v1451 = vunpack.c.l.b16 %v1133
    %v1452 = vunpack.c.h.b16 %v1133
    %v1453 = vunpack.c.l.b16 %v1134
    %v1454 = vunpack.c.h.b16 %v1134
    %v1455 = vunpack.c.l.b16 %v1135
    %v1456 = vunpack.c.l.b16 %v1136
    %v1457 = vunpack.c.h.b16 %v1136
    %v1458 = vunpack.c.l.b16 %v1137
    %v1459 = vunpack.c.h.b16 %v1137
    %v1460 = vunpack.c.l.b16 %v1138
    %v1461 = vunpack.c.h.b16 %v1138
    %v1462 = vunpack.c.l.b16 %v1139
    %v1463 = vunpack.c.l.b16 %v1140
    %v1464 = vunpack.c.h.b16 %v1140
    %v1465 = vunpack.c.l.b16 %v1141
    %v1466 = vunpack.c.h.b16 %v1141
    %v1467 = vunpack.c.l.b16 %v1142
    %v1468 = vunpack.c.h.b16 %v1142
    %v1469 = vunpack.c.l.b16 %v1143
    %v1470 = vunpack.c.l.b16 %v1144
    %v1471 = vunpack.c.h.b16 %v1144
    %v1472 = vunpack.c.l.b16 %v1145
    %v1473 = vunpack.c.h.b16 %v1145
    %v1474 = vunpack.c.l.b16 %v1146
    %v1475 = vunpack.c.h.b16 %v1146
    %v1476 = vunpack.c.l.b16 %v1147
    %v1477 = vunpack.c.l.b16 %v1148
    %v1478 = vunpack.c.h.b16 %v1148
    %v1479 = vunpack.c.l.b16 %v1149
    %v1480 = vunpack.c.h.b16 %v1149
    %v1481 = vunpack.c.l.b16 %v1150
    %v1482 = vunpack.c.h.b16 %v1150
    %v1483 = vunpack.c.l.b16 %v1151
    %v1484 = vunpack.c.l.b16 %v1152
    %v1485 = vunpack.c.h.b16 %v1152
    %v1486 = vunpack.c.l.b16 %v1153
    %v1487 = vunpack.c.h.b16 %v1153
    %v1488 = vunpack.c.l.b16 %v1154
    %v1489 = vunpack.c.h.b16 %v1154
    %v1490 = vunpack.c.l.b16 %v1155
    %v1491 = vunpack.c.l.b16 %v1156
    %v1492 = vunpack.c.h.b16 %v1156
    %v1493 = vunpack.c.l.b16 %v1157
    %v1494 = vunpack.c.h.b16 %v1157
    %v1495 = vunpack.c.l.b16 %v1158
    %v1496 = vunpack.c.h.b16 %v1158
    %v1497 = vunpack.c.l.b16 %v1159
    %v1498 = vunpack.c.l.b16 %v1160
    %v1499 = vunpack.c.h.b16 %v1160
    %v1500 = vunpack.c.l.b16 %v1161
    %v1501 = vunpack.c.h.b16 %v1161
    %v1502 = vunpack.c.l.b16 %v1162
    %v1503 = vunpack.c.h.b16 %v1162
    %v1504 = vunpack.c.l.b16 %v1163
    %v1505 = vunpack.c.l.b16 %v1164
    %v1506 = vunpack.c.h.b16 %v1164
    %v1507 = vunpack.c.l.b16 %v1165
    %v1508 = vunpack.c.h.b16 %v1165
    %v1509 = vunpack.c.l.b16 %v1166
    %v1510 = vunpack.c.h.b16 %v1166
    %v1511 = vunpack.c.l.b16 %v1167
    %v1512 = vunpack.c.l.b16 %v1168
    %v1513 = vunpack.c.h.b16 %v1168
    %v1514 = vunpack.c.l.b16 %v1169
    %v1515 = vunpack.c.h.b16 %v1169
    %v1516 = vunpack.c.l.b16 %v1170
    %v1517 = vunpack.c.h.b16 %v1170
    %v1518 = vunpack.c.l.b16 %v1171
    %v1519 = vunpack.c.l.b16 %v1172
    %v1520 = vunpack.c.h.b16 %v1172
    %v1521 = vunpack.c.l.b16 %v1173
    %v1522 = vunpack.c.h.b16 %v1173
    %v1523 = vunpack.c.l.b16 %v1174
    %v1524 = vunpack.c.h.b16 %v1174
    %v1525 = vunpack.c.l.b16 %v1175
    %v1526 = vunpack.c.l.b16 %v1176
    %v1527 = vunpack.c.h.b16 %v1176
    %v1528 = vunpack.c.l.b16 %v1177
    %v1529 = vunpack.c.h.b16 %v1177
    %v1530 = vunpack.c.l.b16 %v1178
    %v1531 = vunpack.c.h.b16 %v1178
    %v1532 = vunpack.c.l.b16 %v1179
    %v1533 = vunpack.c.l.b16 %v1180
    %v1534 = vunpack.c.h.b16 %v1180
    %v1535 = vunpack.c.l.b16 %v1181
    %v1536 = vunpack.c.h.b16 %v1181
    %v1537 = vunpack.c.l.b16 %v1182
    %v1538 = vunpack.c.h.b16 %v1182
    %v1539 = vunpack.c.l.b16 %v1183
    %v1540 = vunpack.c.l.b16 %v1184
    %v1541 = vunpack.c.h.b16 %v1184
    %v1542 = vunpack.c.l.b16 %v1185
    %v1543 = vunpack.c.h.b16 %v1185
    %v1544 = vunpack.c.l.b16 %v1186
    %v1545 = vunpack.c.h.b16 %v1186
    %v1546 = vunpack.c.l.b16 %v1187
    %v1547 = vunpack.c.l.b16 %v1188
    %v1548 = vunpack.c.h.b16 %v1188
    %v1549 = vunpack.c.l.b16 %v1189
    %v1550 = vunpack.c.h.b16 %v1189
    %v1551 = vunpack.c.l.b16 %v1190
    %v1552 = vunpack.c.h.b16 %v1190
    %v1553 = vunpack.c.l.b16 %v1191
    %v1554 = vunpack.c.l.b16 %v1192
    %v1555 = vunpack.c.h.b16 %v1192
    %v1556 = vunpack.c.l.b16 %v1193
    %v1557 = vunpack.c.h.b16 %v1193
    %v1558 = vunpack.c.l.b16 %v1194
    %v1559 = vunpack.c.h.b16 %v1194
    %v1560 = vunpack.c.l.b16 %v1195
    %v1561 = vunpack.c.l.b16 %v1196
    %v1562 = vunpack.c.h.b16 %v1196
    %v1563 = vunpack.c.l.b16 %v1197
    %v1564 = vunpack.c.h.b16 %v1197
    %v1565 = vunpack.c.l.b16 %v1198
    %v1566 = vunpack.c.h.b16 %v1198
    %v1567 = vunpack.c.l.b16 %v1199
    %v1568 = vunpack.c.l.b16 %v1200
    %v1569 = vunpack.c.h.b16 %v1200
    %v1570 = vunpack.c.l.b16 %v1201
    %v1571 = vunpack.c.h.b16 %v1201
    %v1572 = vunpack.c.l.b16 %v1202
    %v1573 = vunpack.c.h.b16 %v1202
    %v1574 = vunpack.c.l.b16 %v1203
    %v1575 = vunpack.c.l.b16 %v1204
    %v1576 = vunpack.c.h.b16 %v1204
    %v1577 = vunpack.c.l.b16 %v1205
    %v1578 = vunpack.c.h.b16 %v1205
    %v1579 = vunpack.c.l.b16 %v1206
    %v1580 = vunpack.c.h.b16 %v1206
    %v1581 = vunpack.c.l.b16 %v1207
    %v1582 = vunpack.c.l.b16 %v1208
    %v1583 = vunpack.c.h.b16 %v1208
    %v1584 = vunpack.c.l.b16 %v1209
    %v1585 = vunpack.c.h.b16 %v1209
    %v1586 = vunpack.c.l.b16 %v1210
    %v1587 = vunpack.c.h.b16 %v1210
    %v1588 = vunpack.c.l.b16 %v1211
    %v1589 = vunpack.c.l.b16 %v1212
    %v1590 = vunpack.c.h.b16 %v1212
    %v1591 = vunpack.c.l.b16 %v1213
    %v1592 = vunpack.c.h.b16 %v1213
    %v1593 = vunpack.c.l.b16 %v1214
    %v1594 = vunpack.c.h.b16 %v1214
    %v1595 = vunpack.c.l.b16 %v1215
    %v1596 = vunpack.c.l.b16 %v1216
    %v1597 = vunpack.c.h.b16 %v1216
    %v1598 = vunpack.c.l.b16 %v1217
    %v1599 = vunpack.c.h.b16 %v1217
    %v1600 = vunpack.c.l.b16 %v1218
    %v1601 = vunpack.c.h.b16 %v1218
    %v1602 = vunpack.c.l.b16 %v1219
    %v1603 = vunpack.c.l.b16 %v1220
    %v1604 = vunpack.c.h.b16 %v1220
    %v1605 = vunpack.c.l.b16 %v1221
    %v1606 = vunpack.c.h.b16 %v1221
    %v1607 = vunpack.c.l.b16 %v1222
    %v1608 = vunpack.c.h.b16 %v1222
    %v1609 = vunpack.c.l.b16 %v1223
    %v1610 = vunpack.c.l.b16 %v1224
    %v1611 = vunpack.c.h.b16 %v1224
    %v1612 = vunpack.c.l.b16 %v1225
    %v1613 = vunpack.c.h.b16 %v1225
    %v1614 = vunpack.c.l.b16 %v1226
    %v1615 = vunpack.c.h.b16 %v1226
    %v1616 = vunpack.c.l.b16 %v1227
    %v1617 = vpack.c.b16 %v1400, %v1393
    %v1618 = vpack.c.b16 %v1401, %v1394
    %v1619 = vpack.c.b16 %v1402, %v1395
    %v1620 = vpack.c.b16 %v1403, %v1396
    %v1621 = vpack.c.b16 %v1404, %v1397
    %v1622 = vpack.c.b16 %v1405, %v1398
    %v1623 = vpack.c.b16 %v1406, %v1399
    %v1624 = vpack.c.b16 %v1414, %v1407
    %v1625 = vpack.c.b16 %v1415, %v1408
    %v1626 = vpack.c.b16 %v1416, %v1409
    %v1627 = vpack.c.b16 %v1417, %v1410
    %v1628 = vpack.c.b16 %v1418, %v1411
    %v1629 = vpack.c.b16 %v1419, %v1412
    %v1630 = vpack.c.b16 %v1420, %v1413
    %v1631 = vpack.c.b16 %v1428, %v1421
    %v1632 = vpack.c.b16 %v1429, %v1422
    %v1633 = vpack.c.b16 %v1430, %v1423
    %v1634 = vpack.c.b16 %v1431, %v1424
    %v1635 = vpack.c.b16 %v1432, %v1425
    %v1636 = vpack.c.b16 %v1433, %v1426
    %v1637 = vpack.c.b16 %v1434, %v1427
    %v1638 = vpack.c.b16 %v1442, %v1435
    %v1639 = vpack.c.b16 %v1443, %v1436
    %v1640 = vpack.c.b16 %v1444, %v1437
    %v1641 = vpack.c.b16 %v1445, %v1438
    %v1642 = vpack.c.b16 %v1446, %v1439
    %v1643 = vpack.c.b16 %v1447, %v1440
    %v1644 = vpack.c.b16 %v1448, %v1441
    %v1645 = vpack.c.b16 %v1456, %v1449
    %v1646 = vpack.c.b16 %v1457, %v1450
    %v1647 = vpack.c.b16 %v1458, %v1451
    %v1648 = vpack.c.b16 %v1459, %v1452
    %v1649 = vpack.c.b16 %v1460, %v1453
    %v1650 = vpack.c.b16 %v1461, %v1454
    %v1651 = vpack.c.b16 %v1462, %v1455
    %v1652 = vpack.c.b16 %v1470, %v1463
    %v1653 = vpack.c.b16 %v1471, %v1464
    %v1654 = vpack.c.b16 %v1472, %v1465
    %v1655 = vpack.c.b16 %v1473, %v1466
    %v1656 = vpack.c.b16 %v1474, %v1467
    %v1657 = vpack.c.b16 %v1475, %v1468
    %v1658 = vpack.c.b16 %v1476, %v1469
    %v1659 = vpack.c.b16 %v1484, %v1477
    %v1660 = vpack.c.b16 %v1485, %v1478
    %v1661 = vpack.c.b16 %v1486, %v1479
    %v1662 = vpack.c.b16 %v1487, %v1480
    %v1663 = vpack.c.b16 %v1488, %v1481
    %v1664 = vpack.c.b16 %v1489, %v1482
    %v1665 = vpack.c.b16 %v1490, %v1483
    %v1666 = vpack.c.b16 %v1498, %v1491
    %v1667 = vpack.c.b16 %v1499, %v1492
    %v1668 = vpack.c.b16 %v1500, %v1493
    %v1669 = vpack.c.b16 %v1501, %v1494
    %v1670 = vpack.c.b16 %v1502, %v1495
    %v1671 = vpack.c.b16 %v1503, %v1496
    %v1672 = vpack.c.b16 %v1504, %v1497
    %v1673 = vpack.c.b16 %v1512, %v1505
    %v1674 = vpack.c.b16 %v1513, %v1506
    %v1675 = vpack.c.b16 %v1514, %v1507
    %v1676 = vpack.c.b16 %v1515, %v1508
    %v1677 = vpack.c.b16 %v1516, %v1509
    %v1678 = vpack.c.b16 %v1517, %v1510
    %v1679 = vpack.c.b16 %v1518, %v1511
    %v1680 = vpack.c.b16 %v1526, %v1519
    %v1681 = vpack.c.b16 %v1527, %v1520
    %v1682 = vpack.c.b16 %v1528, %v1521
    %v1683 = vpack.c.b16 %v1529, %v1522
    %v1684 = vpack.c.b16 %v1530, %v1523
    %v1685 = vpack.c.b16 %v1531, %v1524
    %v1686 = vpack.c.b16 %v1532, %v1525
    %v1687 = vpack.c.b16 %v1540, %v1533
    %v1688 = vpack.c.b16 %v1541, %v1534
    %v1689 = vpack.c.b16 %v1542, %v1535
    %v1690 = vpack.c.b16 %v1543, %v1536
    %v1691 = vpack.c.b16 %v1544, %v1537
    %v1692 = vpack.c.b16 %v1545, %v1538
    %v1693 = vpack.c.b16 %v1546, %v1539
    %v1694 = vpack.c.b16 %v1554, %v1547
    %v1695 = vpack.c.b16 %v1555, %v1548
    %v1696 = vpack.c.b16 %v1556, %v1549
    %v1697 = vpack.c.b16 %v1557, %v1550
    %v1698 = vpack.c.b16 %v1558, %v1551
    %v1699 = vpack.c.b16 %v1559, %v1552
    %v1700 = vpack.c.b16 %v1560, %v1553
    %v1701 = vpack.c.b16 %v1568, %v1561
    %v1702 = vpack.c.b16 %v1569, %v1562
    %v1703 = vpack.c.b16 %v1570, %v1563
    %v1704 = vpack.c.b16 %v1571, %v1564
    %v1705 = vpack.c.b16 %v1572, %v1565
    %v1706 = vpack.c.b16 %v1573, %v1566
    %v1707 = vpack.c.b16 %v1574, %v1567
    %v1708 = vpack.c.b16 %v1582, %v1575
    %v1709 = vpack.c.b16 %v1583, %v1576
    %v1710 = vpack.c.b16 %v1584, %v1577
    %v1711 = vpack.c.b16 %v1585, %v1578
    %v1712 = vpack.c.b16 %v1586, %v1579
    %v1713 = vpack.c.b16 %v1587, %v1580
    %v1714 = vpack.c.b16 %v1588, %v1581
    %v1715 = vpack.c.b16 %v1596, %v1589
    %v1716 = vpack.c.b16 %v1597, %v1590
    %v1717 = vpack.c.b16 %v1598, %v1591
    %v1718 = vpack.c.b16 %v1599, %v1592
    %v1719 = vpack.c.b16 %v1600, %v1593
    %v1720 = vpack.c.b16 %v1601, %v1594
    %v1721 = vpack.c.b16 %v1602, %v1595
    %v1722 = vpack.c.b16 %v1610, %v1603
    %v1723 = vpack.c.b16 %v1611, %v1604
    %v1724 = vpack.c.b16 %v1612, %v1605
    %v1725 = vpack.c.b16 %v1613, %v1606
    %v1726 = vpack.c.b16 %v1614, %v1607
    %v1727 = vpack.c.b16 %v1615, %v1608
    %v1728 = vpack.c.b16 %v1616, %v1609
    %1841 = vmatprep.subr.bf16.mxu0 %v1618
    %1842 = vmatpush1.bf16.msra.mxu0 %v1617
    %1843 = vmatprep.subr.bf16.mxu0 %v1625
    %1844 = vmatpush1.bf16.msra.mxu0 %v1624
    %1845 = vmatprep.subr.bf16.mxu0 %v1632
    %1846 = vmatpush1.bf16.msra.mxu0 %v1631
    %1847 = vmatprep.subr.bf16.mxu0 %v1639
    %1848 = vmatpush1.bf16.msra.mxu0 %v1638
    %1849 = vmatprep.subr.bf16.mxu0 %v1646
    %1850 = vmatpush1.bf16.msra.mxu0 %v1645
    %1851 = vmatprep.subr.bf16.mxu0 %v1653
    %1852 = vmatpush1.bf16.msra.mxu0 %v1652
    %1853 = vmatprep.subr.bf16.mxu0 %v1660
    %1854 = vmatpush1.bf16.msra.mxu0 %v1659
    %1855 = vmatprep.subr.bf16.mxu0 %v1667
    %1856 = vmatpush1.bf16.msra.mxu0 %v1666
    %1857 = vmatprep.subr.bf16.mxu0 %v1674
    %1858 = vmatpush1.bf16.msra.mxu0 %v1673
    %1859 = vmatprep.subr.bf16.mxu0 %v1681
    %1860 = vmatpush1.bf16.msra.mxu0 %v1680
    %1861 = vmatprep.subr.bf16.mxu0 %v1688
    %1862 = vmatpush1.bf16.msra.mxu0 %v1687
    %1863 = vmatprep.subr.bf16.mxu0 %v1695
    %1864 = vmatpush1.bf16.msra.mxu0 %v1694
    %1865 = vmatprep.subr.bf16.mxu0 %v1702
    %1866 = vmatpush1.bf16.msra.mxu0 %v1701
    %1867 = vmatprep.subr.bf16.mxu0 %v1709
    %1868 = vmatpush1.bf16.msra.mxu0 %v1708
    %1869 = vmatprep.subr.bf16.mxu0 %v1716
    %1870 = vmatpush1.bf16.msra.mxu0 %v1715
    %1871 = vmatprep.subr.bf16.mxu0 %v1723
    %1872 = vmatpush1.bf16.msra.mxu0 %v1722
    %1873 = vmatprep.mubr.bf16.mxu0 %v1099
    %1874 = vmatmul.mubr.bf16.gmra.mrb[0].mxu0 %v1098
    %v1875 = vpop.f32.mrb[0].mxu0
    %v1876 = vadd.f32 %v1233, %v1875
    %v1877 = vpop.f32.mrb[0].mxu0
    %v1878 = vadd.f32 %v1237, %v1877
    %v1879 = vpop.f32.mrb[0].mxu0
    %v1880 = vpop.f32.mrb[0].mxu0
    %1881 = vdwg.mxu0
    %1882 = vmatprep.subr.bf16.mxu0 %v1620
    %1883 = vmatpush1.bf16.msra.mxu0 %v1619
    %1884 = vmatprep.subr.bf16.mxu0 %v1627
    %1885 = vmatpush1.bf16.msra.mxu0 %v1626
    %1886 = vmatprep.subr.bf16.mxu0 %v1634
    %1887 = vmatpush1.bf16.msra.mxu0 %v1633
    %1888 = vmatprep.subr.bf16.mxu0 %v1641
    %1889 = vmatpush1.bf16.msra.mxu0 %v1640
    %1890 = vmatprep.subr.bf16.mxu0 %v1648
    %1891 = vmatpush1.bf16.msra.mxu0 %v1647
    %1892 = vmatprep.subr.bf16.mxu0 %v1655
    %1893 = vmatpush1.bf16.msra.mxu0 %v1654
    %1894 = vmatprep.subr.bf16.mxu0 %v1662
    %1895 = vmatpush1.bf16.msra.mxu0 %v1661
    %1896 = vmatprep.subr.bf16.mxu0 %v1669
    %1897 = vmatpush1.bf16.msra.mxu0 %v1668
    %1898 = vmatprep.subr.bf16.mxu0 %v1676
    %1899 = vmatpush1.bf16.msra.mxu0 %v1675
    %1900 = vmatprep.subr.bf16.mxu0 %v1683
    %1901 = vmatpush1.bf16.msra.mxu0 %v1682
    %1902 = vmatprep.subr.bf16.mxu0 %v1690
    %1903 = vmatpush1.bf16.msra.mxu0 %v1689
    %1904 = vmatprep.subr.bf16.mxu0 %v1697
    %1905 = vmatpush1.bf16.msra.mxu0 %v1696
    %1906 = vmatprep.subr.bf16.mxu0 %v1704
    %1907 = vmatpush1.bf16.msra.mxu0 %v1703
    %1908 = vmatprep.subr.bf16.mxu0 %v1711
    %1909 = vmatpush1.bf16.msra.mxu0 %v1710
    %1910 = vmatprep.subr.bf16.mxu0 %v1718
    %1911 = vmatpush1.bf16.msra.mxu0 %v1717
    %1912 = vmatprep.subr.bf16.mxu0 %v1725
    %1913 = vmatpush1.bf16.msra.mxu0 %v1724
    %1914 = vmatprep.mubr.bf16.mxu0 %v1099
    %1915 = vmatmul.mubr.bf16.gmra.mrb[0].mxu0 %v1098
    %v1916 = vpop.f32.mrb[0].mxu0
    %v1917 = vadd.f32 %v1241, %v1916
    %v1918 = vpop.f32.mrb[0].mxu0
    %v1919 = vadd.f32 %v1245, %v1918
    %v1920 = vpop.f32.mrb[0].mxu0
    %v1921 = vpop.f32.mrb[0].mxu0
    %1922 = vdwg.mxu0
    %1923 = vmatprep.subr.bf16.mxu0 %v1622
    %1924 = vmatpush1.bf16.msra.mxu0 %v1621
    %1925 = vmatprep.subr.bf16.mxu0 %v1629
    %1926 = vmatpush1.bf16.msra.mxu0 %v1628
    %1927 = vmatprep.subr.bf16.mxu0 %v1636
    %1928 = vmatpush1.bf16.msra.mxu0 %v1635
    %1929 = vmatprep.subr.bf16.mxu0 %v1643
    %1930 = vmatpush1.bf16.msra.mxu0 %v1642
    %1931 = vmatprep.subr.bf16.mxu0 %v1650
    %1932 = vmatpush1.bf16.msra.mxu0 %v1649
    %1933 = vmatprep.subr.bf16.mxu0 %v1657
    %1934 = vmatpush1.bf16.msra.mxu0 %v1656
    %1935 = vmatprep.subr.bf16.mxu0 %v1664
    %1936 = vmatpush1.bf16.msra.mxu0 %v1663
    %1937 = vmatprep.subr.bf16.mxu0 %v1671
    %1938 = vmatpush1.bf16.msra.mxu0 %v1670
    %1939 = vmatprep.subr.bf16.mxu0 %v1678
    %1940 = vmatpush1.bf16.msra.mxu0 %v1677
    %1941 = vmatprep.subr.bf16.mxu0 %v1685
    %1942 = vmatpush1.bf16.msra.mxu0 %v1684
    %1943 = vmatprep.subr.bf16.mxu0 %v1692
    %1944 = vmatpush1.bf16.msra.mxu0 %v1691
    %1945 = vmatprep.subr.bf16.mxu0 %v1699
    %1946 = vmatpush1.bf16.msra.mxu0 %v1698
    %1947 = vmatprep.subr.bf16.mxu0 %v1706
    %1948 = vmatpush1.bf16.msra.mxu0 %v1705
    %1949 = vmatprep.subr.bf16.mxu0 %v1713
    %1950 = vmatpush1.bf16.msra.mxu0 %v1712
    %1951 = vmatprep.subr.bf16.mxu0 %v1720
    %1952 = vmatpush1.bf16.msra.mxu0 %v1719
    %1953 = vmatprep.subr.bf16.mxu0 %v1727
    %1954 = vmatpush1.bf16.msra.mxu0 %v1726
    %1955 = vmatprep.mubr.bf16.mxu0 %v1099
    %1956 = vmatmul.mubr.bf16.gmra.mrb[0].mxu0 %v1098
    %v1957 = vpop.f32.mrb[0].mxu0
    %v1958 = vadd.f32 %v1249, %v1957
    %v1959 = vpop.f32.mrb[0].mxu0
    %v1960 = vadd.f32 %v1253, %v1959
    %v1961 = vpop.f32.mrb[0].mxu0
    %v1962 = vpop.f32.mrb[0].mxu0
    %1963 = vdwg.mxu0
    %1964 = vmatprep.subr.bf16.mxu0 0
    %1965 = vmatpush1.bf16.msra.mxu0 %v1623
    %1966 = vmatprep.subr.bf16.mxu0 0
    %1967 = vmatpush1.bf16.msra.mxu0 %v1630
    %1968 = vmatprep.subr.bf16.mxu0 0
    %1969 = vmatpush1.bf16.msra.mxu0 %v1637
    %1970 = vmatprep.subr.bf16.mxu0 0
    %1971 = vmatpush1.bf16.msra.mxu0 %v1644
    %1972 = vmatprep.subr.bf16.mxu0 0
    %1973 = vmatpush1.bf16.msra.mxu0 %v1651
    %1974 = vmatprep.subr.bf16.mxu0 0
    %1975 = vmatpush1.bf16.msra.mxu0 %v1658
    %1976 = vmatprep.subr.bf16.mxu0 0
    %1977 = vmatpush1.bf16.msra.mxu0 %v1665
    %1978 = vmatprep.subr.bf16.mxu0 0
    %1979 = vmatpush1.bf16.msra.mxu0 %v1672
    %1980 = vmatprep.subr.bf16.mxu0 0
    %1981 = vmatpush1.bf16.msra.mxu0 %v1679
    %1982 = vmatprep.subr.bf16.mxu0 0
    %1983 = vmatpush1.bf16.msra.mxu0 %v1686
    %1984 = vmatprep.subr.bf16.mxu0 0
    %1985 = vmatpush1.bf16.msra.mxu0 %v1693
    %1986 = vmatprep.subr.bf16.mxu0 0
    %1987 = vmatpush1.bf16.msra.mxu0 %v1700
    %1988 = vmatprep.subr.bf16.mxu0 0
    %1989 = vmatpush1.bf16.msra.mxu0 %v1707
    %1990 = vmatprep.subr.bf16.mxu0 0
    %1991 = vmatpush1.bf16.msra.mxu0 %v1714
    %1992 = vmatprep.subr.bf16.mxu0 0
    %1993 = vmatpush1.bf16.msra.mxu0 %v1721
    %1994 = vmatprep.subr.bf16.mxu0 0
    %1995 = vmatpush1.bf16.msra.mxu0 %v1728
    %1996 = vmatprep.mubr.bf16.mxu0 %v1099
    %1997 = vmatmul.mubr.bf16.gmra.mrb[0].mxu0 %v1098
    %v1998 = vpop.f32.mrb[0].mxu0
    %v1999 = vadd.f32 %v1257, %v1998
    %v2000 = vpop.f32.mrb[0].mxu0
    %v2001 = vpop.f32.mrb[0].mxu0
    %v2002 = vpop.f32.mrb[0].mxu0
    %2003 = vdwg.mxu0
    %v2004 = vsub.f32 0.0, %v1876
    %v2005 = vsub.f32 0.0, %v1878
    %v2006 = vsub.f32 0.0, %v1917
    %v2007 = vsub.f32 0.0, %v1919
    %v2008 = vsub.f32 0.0, %v1958
    %v2009 = vsub.f32 0.0, %v1960
    %v2010 = vsub.f32 0.0, %v1999
    %v2011 = vmul.f32 %v2004, 1.442695
    %v2012 = vpow.pop %v2011
    %v2013 = vmul.f32 %v2005, 1.442695
    %v2014 = vpow.pop %v2013
    %v2015 = vmul.f32 %v2006, 1.442695
    %v2016 = vpow.pop %v2015
    %v2017 = vmul.f32 %v2007, 1.442695
    %v2018 = vpow.pop %v2017
    %v2019 = vmul.f32 %v2008, 1.442695
    %v2020 = vpow.pop %v2019
    %v2021 = vmul.f32 %v2009, 1.442695
    %v2022 = vpow.pop %v2021
    %v2023 = vmul.f32 %v2010, 1.442695
    %v2024 = vpow.pop %v2023
    %v2025 = vadd.f32 %v2012, 1.0
    %v2026 = vadd.f32 %v2014, 1.0
    %v2027 = vadd.f32 %v2016, 1.0
    %v2028 = vadd.f32 %v2018, 1.0
    %v2029 = vadd.f32 %v2020, 1.0
    %v2030 = vadd.f32 %v2022, 1.0
    %v2031 = vadd.f32 %v2024, 1.0
    %v2032 = vrcp.pop %v2025
    %v2033 = vrcp.pop %v2026
    %v2034 = vrcp.pop %v2027
    %v2035 = vrcp.pop %v2028
    %v2036 = vrcp.pop %v2029
    %v2037 = vrcp.pop %v2030
    %v2038 = vrcp.pop %v2031
    %2039 = vst [vmem:[#allocation2] sm:$0xff] %v2032
    %2040 = vst [vmem:[#allocation2 + $0x8] sm:$0xff] %v2033
    %2041 = vst [vmem:[#allocation2 + $0x10] sm:$0xff] %v2034
    %2042 = vst [vmem:[#allocation2 + $0x18] sm:$0xff] %v2035
    %2043 = vst [vmem:[#allocation2 + $0x20] sm:$0xff] %v2036
    %2044 = vst [vmem:[#allocation2 + $0x28] sm:$0xff] %v2037
    %2045 = vst.msk [vmem:[#allocation2 + $0x30] sm:$0xff] %vm668, %v2038
    // Predicated region
    $region42: #{tpu_custom_call.1} parent=1 // pred_check
      _
    $region43: #{tpu_custom_call.1} parent=1 // pred_check_branch
      %2047 = sbr.rel (0) target = $region45
    $region44: #{tpu_custom_call.1} parent=1 // pred_region
      %s2049 = ssub.s32 896, 896
      %2050 = vsyncadd [#allocation3], %s2049
      %s2052 = sshll.u32 [#allocation2], 4
      %s2053 = int_to_ptr.vmem [resolvable:$true] %s2052
      %2055 = dma.vmem_to_hbm [thread:$0]  %s2053, 896, %s10, [#allocation3]
    $region45: #{tpu_custom_call.1} parent=1 // pred_fallthru
      _
    // Predicated region
    $region46: #{tpu_custom_call.1} parent=1 // pred_check
      _
    $region47: #{tpu_custom_call.1} parent=1 // pred_check_branch
      %2057 = sbr.rel (0) target = $region49
    $region48: #{tpu_custom_call.1} parent=1 // pred_region
      %s2059 = ssub.s32 128, 128
      %2060 = vsyncadd [#allocation5], %s2059
      %s2062 = sshll.u32 [#allocation4], 4
      %s2063 = int_to_ptr.vmem [resolvable:$true] %s2062
      %2065 = dma.vmem_to_hbm [thread:$0]  %s2063, 128, %s11, [#allocation5]
    $region49: #{tpu_custom_call.1} parent=1 // pred_fallthru
      _
    // Predicated region
    $region50: #{tpu_custom_call.1} parent=1 // pred_check
      _
    $region51: #{tpu_custom_call.1} parent=1 // pred_check_branch
      %2067 = sbr.rel (0) target = $region53
    $region52: #{tpu_custom_call.1} parent=1 // pred_region
      %2068 = dma.done [#allocation3], 896
    $region53: #{tpu_custom_call.1} parent=1 // pred_fallthru
      _
    // Predicated region
    $region54: #{tpu_custom_call.1} parent=1 // pred_check
      _
    $region55: #{tpu_custom_call.1} parent=1 // pred_check_branch
      %2070 = sbr.rel (0) target = $region57
    $region56: #{tpu_custom_call.1} parent=1 // pred_region
      %2071 = dma.done [#allocation5], 128
    $region57: #{tpu_custom_call.1} parent=1 // pred_fallthru
      _
    %2072 = vsyncpa [#allocation3], 1
    %2073 = vsyncpa [#allocation5], 1

</llo_original>
